<compile_context>
chip_gen: v5e
topology: v5e:2x2
jax: 0.10.0
libtpu: 0.0.40
codegen_flags: <defaults>
</compile_context>

<pallas_src>
import jax
import jax.numpy as jnp
import numpy as np
from jax.experimental import pallas as pl
from jax.experimental.pallas import tpu as pltpu

HDIM = 384       # self.hdim
AA_DIM = 256     # self.get_aa_embed_dim()
NUM_AA = 20      # len(one_letters)
PAIR_DIM = 128   # openfold c_z (pass-through only)
EPS = 1e-5       # nn.LayerNorm default
NVEC = 16        # packed 1-D-parameter slab rows (10 used, padded to 16)


def _round_up(n, m):
    return ((n + m - 1) // m) * m


def _pick_row_tile(L):
    """Generation-aware row tile: 128 on v5*, 256 on v6e/v7x; clamp to seq."""
    try:
        kind = jax.devices()[0].device_kind.lower()
    except Exception:  # no devices visible at trace time
        kind = ""
    tl = 128 if "v5" in kind else 256
    # Never make the tile (much) larger than the padded sequence itself.
    return min(tl, _round_up(max(L, 8), 8))


def _layernorm(x, w, b):
    mu = jnp.mean(x, axis=-1, keepdims=True)
    xc = x - mu
    var = jnp.mean(xc * xc, axis=-1, keepdims=True)
    return xc * jax.lax.rsqrt(var + EPS) * w + b


def backbone_head_kernel(f1_ref, f2_ref, vec_ref,
                         w1a_ref, w2a_ref, w1b_ref, w2b_ref,
                         out_ref):
    """out = bb_adapter1(ln(feat1)) + bb_adapter2(ln(feat2)) for one row-tile.

    vec_ref packs (rows): 0 ln_w, 1 ln_b,
                          2..5 adapter1 {b1, b2, nw, nb},
                          6..9 adapter2 {b1, b2, nw, nb}.
    Weight refs are [384, 384] bf16, already transposed to (in, out).
    """
    vecs = vec_ref[...]                      # [16, 384] f32
    ln_w, ln_b = vecs[0:1], vecs[1:2]
    b1a, b2a, nwa, nba = vecs[2:3], vecs[3:4], vecs[4:5], vecs[5:6]
    b1b, b2b, nwb, nbb = vecs[6:7], vecs[7:8], vecs[8:9], vecs[9:10]

    def ffn(x, w1, b1, w2, b2, nw, nb):
        # FFNLayer forward_post: linear1 -> relu -> linear2 -> residual -> LN
        # (dropout p=0 / eval mode -> identity). bf16 matmuls, f32 accumulate.
        h = jnp.maximum(
            jnp.dot(x.astype(jnp.bfloat16), w1,
                    preferred_element_type=jnp.float32) + b1, 0.0)
        t = jnp.dot(h.astype(jnp.bfloat16), w2,
                    preferred_element_type=jnp.float32) + b2
        return _layernorm(x + t, nw, nb)

    # Shared LayerNorm (same ln_w/ln_b) on each feature stream.
    x1 = _layernorm(f1_ref[...], ln_w, ln_b)
    x2 = _layernorm(f2_ref[...], ln_w, ln_b)

    y1 = ffn(x1, w1a_ref[...], b1a, w2a_ref[...], b2a, nwa, nba)
    y2 = ffn(x2, w1b_ref[...], b1b, w2b_ref[...], b2b, nwb, nbb)
    out_ref[...] = y1 + y2


def backbone_head(feat1, feat2, packed, *, tl=None):
    L, D = feat1.shape
    assert D == HDIM
    if tl is None:
        tl = _pick_row_tile(L)
    assert tl % 8 == 0
    Lp = _round_up(L, tl)
    if Lp != L:
        pad = ((0, Lp - L), (0, 0))
        feat1 = jnp.pad(feat1, pad)
        feat2 = jnp.pad(feat2, pad)

    vecs, w1a, w2a, w1b, w2b = packed

    row_spec = pl.BlockSpec((tl, D), lambda i: (i, 0))
    vec_spec = pl.BlockSpec((NVEC, D), lambda i: (0, 0))
    mat_spec = pl.BlockSpec((D, D), lambda i: (0, 0))

    cost = pl.CostEstimate(
        flops=4 * 2 * Lp * D * D,                      # four [*,384]x[384,384]
        transcendentals=0,
        bytes_accessed=3 * Lp * D * 4 + 4 * D * D * 2 + NVEC * D * 4,
    )

    out = pl.pallas_call(
        backbone_head_kernel,
        out_shape=jax.ShapeDtypeStruct((Lp, D), jnp.float32),
        grid_spec=pltpu.PrefetchScalarGridSpec(
            num_scalar_prefetch=0,
            grid=(Lp // tl,),
            in_specs=[row_spec, row_spec, vec_spec,
                      mat_spec, mat_spec, mat_spec, mat_spec],
            out_specs=row_spec,
        ),
        compiler_params=pltpu.CompilerParams(
            dimension_semantics=("parallel",)),
        cost_estimate=cost,
    )(feat1, feat2, vecs, w1a, w2a, w1b, w2b)
    return out[:L]


# ------------------------- parameter / input setup -------------------------

def init_params(key):
    """Deterministic synthetic parameters matching the module's shapes."""
    ks = jax.random.split(key, 16)
    s = 0.05

    def lin(k, out_f, in_f):
        # PyTorch nn.Linear convention: weight [out, in], y = x @ W.T + b
        kw, kb = jax.random.split(k)
        w = jax.random.normal(kw, (out_f, in_f), jnp.float32) * s
        b = jax.random.normal(kb, (out_f,), jnp.float32) * s
        return w, b

    ln_w = 1.0 + 0.1 * jax.random.normal(ks[0], (HDIM,), jnp.float32)
    ln_b = 0.1 * jax.random.normal(ks[1], (HDIM,), jnp.float32)

    def adapter(k):
        k1, k2, k3, k4 = jax.random.split(k, 4)
        w1, b1 = lin(k1, HDIM, HDIM)
        w2, b2 = lin(k2, HDIM, HDIM)
        nw = 1.0 + 0.1 * jax.random.normal(k3, (HDIM,), jnp.float32)
        nb = 0.1 * jax.random.normal(k4, (HDIM,), jnp.float32)
        return dict(w1=w1, b1=b1, w2=w2, b2=b2, nw=nw, nb=nb)

    a1 = adapter(ks[2])
    a2 = adapter(ks[3])

    # aa_embed = masked_msa linear weight [23, 256]; ln_head over 256
    aa_embed = jax.random.normal(ks[4], (23, AA_DIM), jnp.float32) * s
    ln_head_w = 1.0 + 0.1 * jax.random.normal(ks[5], (AA_DIM,), jnp.float32)
    ln_head_b = 0.1 * jax.random.normal(ks[6], (AA_DIM,), jnp.float32)
    # stand-in for [restype_order[aa] for aa in one_letters] (fixed permutation)
    openfold_to_our_aatype = jnp.array(
        [0, 4, 3, 6, 13, 7, 8, 9, 11, 10, 12, 2, 14, 5, 1, 15, 16, 19, 17, 18],
        dtype=jnp.int32)

    return dict(ln_w=ln_w, ln_b=ln_b, a1=a1, a2=a2, aa_embed=aa_embed,
                ln_head_w=ln_head_w, ln_head_b=ln_head_b,
                aa_map=openfold_to_our_aatype)


def pack_head_params(p):
    """Pack 1-D params into one [16,384] f32 slab; weights -> (in,out) bf16."""
    a1, a2 = p["a1"], p["a2"]
    rows = jnp.stack([
        p["ln_w"], p["ln_b"],
        a1["b1"], a1["b2"], a1["nw"], a1["nb"],
        a2["b1"], a2["b2"], a2["nw"], a2["nb"],
    ]).astype(jnp.float32)                                   # [10, 384]
    vecs = jnp.zeros((NVEC, HDIM), jnp.float32).at[:rows.shape[0]].set(rows)

    t16 = lambda w: jnp.asarray(w).T.astype(jnp.bfloat16)    # [out,in]->[in,out]
    return (vecs,
            t16(a1["w1"]), t16(a1["w2"]),
            t16(a2["w1"]), t16(a2["w2"]))


def alphafold_backbone_forward(af_out, p, af_extract_feat="both",
                               aa_expand=True, tl=None):
    """Mirrors AlphaFoldBackbone.forward given (synthesized) AlphaFold outputs."""
    # TODO(synk): the AlphaFold backbone itself (openfold evoformer + structure
    # module) is not translated; its outputs are taken as inputs here.
    assert af_extract_feat == "both"  # kernel fuses both adapters
    feat1 = af_out["single_post_evoformer"]
    feat2 = af_out["single_post_structure_module"]

    x = backbone_head(feat1, feat2, pack_head_params(p), tl=tl)

    ret = {
        "bb_feat": x[None],
        "af_pair": af_out["pair"][None],
        "af_single_post_evoformer": feat1[None],
        "af_single_post_structure_module": feat2[None],
    }
    if aa_expand:
        # A 20x256 LayerNorm is far smaller than pallas_call launch overhead,
        # so it stays in plain jnp/XLA.
        rows = p["aa_embed"][p["aa_map"]]                    # [20, 256] gather
        mu = rows.mean(-1, keepdims=True)
        var = ((rows - mu) ** 2).mean(-1, keepdims=True)
        aa = (rows - mu) * jax.lax.rsqrt(var + EPS) * p["ln_head_w"] + p["ln_head_b"]
        ret["aa_embed"] = aa[None]
    return ret


# --------------------------- pure-JAX reference ----------------------------

def ref_forward(af_out, p):
    def ln(x, w, b):
        mu = x.mean(-1, keepdims=True)
        var = ((x - mu) ** 2).mean(-1, keepdims=True)
        return (x - mu) / jnp.sqrt(var + EPS) * w + b

    def ffn(x, a):
        h = jnp.maximum(x @ a["w1"].T + a["b1"], 0.0)
        t = h @ a["w2"].T + a["b2"]
        return ln(x + t, a["nw"], a["nb"])

    f1 = af_out["single_post_evoformer"]
    f2 = af_out["single_post_structure_module"]
    x = ffn(ln(f1, p["ln_w"], p["ln_b"]), p["a1"]) + \
        ffn(ln(f2, p["ln_w"], p["ln_b"]), p["a2"])
    aa = ln(p["aa_embed"][p["aa_map"]], p["ln_head_w"], p["ln_head_b"])
    return x[None], aa[None]


if __name__ == "__main__":
    L = 20  # small residue count, deliberately NOT a multiple of 8 (bs fixed to 1)

    key = jax.random.PRNGKey(0)
    kp, k1, k2, k3 = jax.random.split(key, 4)
    params = init_params(kp)

    af_out = {
        "single_post_evoformer": jax.random.normal(k1, (L, HDIM), jnp.float32),
        "single_post_structure_module": jax.random.normal(k2, (L, HDIM), jnp.float32),
        "pair": jax.random.normal(k3, (L, L, PAIR_DIM), jnp.float32),
    }

    bb_ref, aa_ref = ref_forward(af_out, params)

    # 1) default (auto) tile: single padded tile covering the whole sequence
    ret = alphafold_backbone_forward(af_out, params)
    jax.block_until_ready(ret)
    # bf16 matmuls with f32 accumulation -> slightly looser tolerance than f32
    np.testing.assert_allclose(np.asarray(ret["bb_feat"]), np.asarray(bb_ref),
                               rtol=5e-2, atol=5e-2)
    np.testing.assert_allclose(np.asarray(ret["aa_embed"]), np.asarray(aa_ref),
                               rtol=1e-5, atol=1e-5)
    assert ret["bb_feat"].shape == (1, L, HDIM)
    assert ret["af_pair"].shape == (1, L, L, PAIR_DIM)
    assert ret["aa_embed"].shape == (1, NUM_AA, AA_DIM)

    # 2) multi-step grid + tail padding path (tl=16 -> grid of 2, 12 pad rows)
    ret2 = alphafold_backbone_forward(af_out, params, tl=16)
    jax.block_until_ready(ret2)
    np.testing.assert_allclose(np.asarray(ret2["bb_feat"]), np.asarray(bb_ref),
                               rtol=5e-2, atol=5e-2)

    print("KERNEL_OK")
</pallas_src>

<mosaic_0001>
module attributes {stable_mosaic.version = 11 : i64} {
  func.func @backbone_head_kernel(%arg0: i32, %arg1: memref<24x384xf32, #tpu.memory_space<vmem>>, %arg2: memref<24x384xf32, #tpu.memory_space<vmem>>, %arg3: memref<16x384xf32, #tpu.memory_space<vmem>>, %arg4: memref<384x384xbf16, #tpu.memory_space<vmem>>, %arg5: memref<384x384xbf16, #tpu.memory_space<vmem>>, %arg6: memref<384x384xbf16, #tpu.memory_space<vmem>>, %arg7: memref<384x384xbf16, #tpu.memory_space<vmem>>, %arg8: memref<24x384xf32, #tpu.memory_space<vmem>>) attributes {dimension_semantics = [#tpu.dimension_semantics<parallel>], iteration_bounds = array<i64: 1>, scalar_prefetch = 0 : i64, scratch_operands = 0 : i64, tpu.core_type = #tpu.core_type<tc>, window_params = [{transform_indices = @transform_0, window_bounds = array<i64: 24, 384>}, {transform_indices = @transform_1, window_bounds = array<i64: 24, 384>}, {pipeline_mode = #tpu.pipeline_mode<synchronous>, transform_indices = @transform_2, window_bounds = array<i64: 16, 384>}, {pipeline_mode = #tpu.pipeline_mode<synchronous>, transform_indices = @transform_3, window_bounds = array<i64: 384, 384>}, {pipeline_mode = #tpu.pipeline_mode<synchronous>, transform_indices = @transform_4, window_bounds = array<i64: 384, 384>}, {pipeline_mode = #tpu.pipeline_mode<synchronous>, transform_indices = @transform_5, window_bounds = array<i64: 384, 384>}, {pipeline_mode = #tpu.pipeline_mode<synchronous>, transform_indices = @transform_6, window_bounds = array<i64: 384, 384>}, {transform_indices = @transform_7, window_bounds = array<i64: 24, 384>}]} {
    %c0 = arith.constant 0 : index
    %c0_0 = arith.constant 0 : index
    %0 = vector.load %arg3[%c0, %c0_0] : memref<16x384xf32, #tpu.memory_space<vmem>>, vector<16x384xf32>
    %1 = vector.extract_strided_slice %0 {offsets = [0, 0], sizes = [1, 384], strides = [1, 1]} : vector<16x384xf32> to vector<1x384xf32>
    %2 = vector.extract_strided_slice %0 {offsets = [1, 0], sizes = [1, 384], strides = [1, 1]} : vector<16x384xf32> to vector<1x384xf32>
    %3 = vector.extract_strided_slice %0 {offsets = [2, 0], sizes = [1, 384], strides = [1, 1]} : vector<16x384xf32> to vector<1x384xf32>
    %4 = vector.extract_strided_slice %0 {offsets = [3, 0], sizes = [1, 384], strides = [1, 1]} : vector<16x384xf32> to vector<1x384xf32>
    %5 = vector.extract_strided_slice %0 {offsets = [4, 0], sizes = [1, 384], strides = [1, 1]} : vector<16x384xf32> to vector<1x384xf32>
    %6 = vector.extract_strided_slice %0 {offsets = [5, 0], sizes = [1, 384], strides = [1, 1]} : vector<16x384xf32> to vector<1x384xf32>
    %7 = vector.extract_strided_slice %0 {offsets = [6, 0], sizes = [1, 384], strides = [1, 1]} : vector<16x384xf32> to vector<1x384xf32>
    %8 = vector.extract_strided_slice %0 {offsets = [7, 0], sizes = [1, 384], strides = [1, 1]} : vector<16x384xf32> to vector<1x384xf32>
    %9 = vector.extract_strided_slice %0 {offsets = [8, 0], sizes = [1, 384], strides = [1, 1]} : vector<16x384xf32> to vector<1x384xf32>
    %10 = vector.extract_strided_slice %0 {offsets = [9, 0], sizes = [1, 384], strides = [1, 1]} : vector<16x384xf32> to vector<1x384xf32>
    %c0_1 = arith.constant 0 : index
    %c0_2 = arith.constant 0 : index
    %11 = vector.load %arg1[%c0_1, %c0_2] : memref<24x384xf32, #tpu.memory_space<vmem>>, vector<24x384xf32>
    %cst = arith.constant dense<0.000000e+00> : vector<24xf32>
    %12 = vector.multi_reduction <add>, %11, %cst [1] : vector<24x384xf32> to vector<24xf32>
    %13 = vector.shape_cast %12 : vector<24xf32> to vector<24x1xf32>
    %cst_3 = arith.constant 3.840000e+02 : f32
    %14 = vector.broadcast %cst_3 : f32 to vector<24x1xf32>
    %15 = arith.divf %13, %14 : vector<24x1xf32>
    %16 = vector.broadcast %15 : vector<24x1xf32> to vector<24x384xf32>
    %17 = arith.subf %11, %16 : vector<24x384xf32>
    %18 = arith.mulf %17, %17 : vector<24x384xf32>
    %cst_4 = arith.constant dense<0.000000e+00> : vector<24xf32>
    %19 = vector.multi_reduction <add>, %18, %cst_4 [1] : vector<24x384xf32> to vector<24xf32>
    %20 = vector.shape_cast %19 : vector<24xf32> to vector<24x1xf32>
    %cst_5 = arith.constant 3.840000e+02 : f32
    %21 = vector.broadcast %cst_5 : f32 to vector<24x1xf32>
    %22 = arith.divf %20, %21 : vector<24x1xf32>
    %cst_6 = arith.constant 9.99999974E-6 : f32
    %23 = vector.broadcast %cst_6 : f32 to vector<24x1xf32>
    %24 = arith.addf %22, %23 : vector<24x1xf32>
    %25 = math.rsqrt %24 : vector<24x1xf32>
    %26 = vector.broadcast %25 : vector<24x1xf32> to vector<24x384xf32>
    %27 = arith.mulf %17, %26 : vector<24x384xf32>
    %28 = vector.broadcast %1 : vector<1x384xf32> to vector<24x384xf32>
    %29 = arith.mulf %27, %28 : vector<24x384xf32>
    %30 = vector.broadcast %2 : vector<1x384xf32> to vector<24x384xf32>
    %31 = arith.addf %29, %30 : vector<24x384xf32>
    %c0_7 = arith.constant 0 : index
    %c0_8 = arith.constant 0 : index
    %32 = vector.load %arg2[%c0_7, %c0_8] : memref<24x384xf32, #tpu.memory_space<vmem>>, vector<24x384xf32>
    %cst_9 = arith.constant dense<0.000000e+00> : vector<24xf32>
    %33 = vector.multi_reduction <add>, %32, %cst_9 [1] : vector<24x384xf32> to vector<24xf32>
    %34 = vector.shape_cast %33 : vector<24xf32> to vector<24x1xf32>
    %cst_10 = arith.constant 3.840000e+02 : f32
    %35 = vector.broadcast %cst_10 : f32 to vector<24x1xf32>
    %36 = arith.divf %34, %35 : vector<24x1xf32>
    %37 = vector.broadcast %36 : vector<24x1xf32> to vector<24x384xf32>
    %38 = arith.subf %32, %37 : vector<24x384xf32>
    %39 = arith.mulf %38, %38 : vector<24x384xf32>
    %cst_11 = arith.constant dense<0.000000e+00> : vector<24xf32>
    %40 = vector.multi_reduction <add>, %39, %cst_11 [1] : vector<24x384xf32> to vector<24xf32>
    %41 = vector.shape_cast %40 : vector<24xf32> to vector<24x1xf32>
    %cst_12 = arith.constant 3.840000e+02 : f32
    %42 = vector.broadcast %cst_12 : f32 to vector<24x1xf32>
    %43 = arith.divf %41, %42 : vector<24x1xf32>
    %cst_13 = arith.constant 9.99999974E-6 : f32
    %44 = vector.broadcast %cst_13 : f32 to vector<24x1xf32>
    %45 = arith.addf %43, %44 : vector<24x1xf32>
    %46 = math.rsqrt %45 : vector<24x1xf32>
    %47 = vector.broadcast %46 : vector<24x1xf32> to vector<24x384xf32>
    %48 = arith.mulf %38, %47 : vector<24x384xf32>
    %49 = vector.broadcast %1 : vector<1x384xf32> to vector<24x384xf32>
    %50 = arith.mulf %48, %49 : vector<24x384xf32>
    %51 = vector.broadcast %2 : vector<1x384xf32> to vector<24x384xf32>
    %52 = arith.addf %50, %51 : vector<24x384xf32>
    %c0_14 = arith.constant 0 : index
    %c0_15 = arith.constant 0 : index
    %53 = vector.load %arg4[%c0_14, %c0_15] : memref<384x384xbf16, #tpu.memory_space<vmem>>, vector<384x384xbf16>
    %c0_16 = arith.constant 0 : index
    %c0_17 = arith.constant 0 : index
    %54 = vector.load %arg5[%c0_16, %c0_17] : memref<384x384xbf16, #tpu.memory_space<vmem>>, vector<384x384xbf16>
    %55 = arith.truncf %31 : vector<24x384xf32> to vector<24x384xbf16>
    %cst_18 = arith.constant dense<0.000000e+00> : vector<24x384xf32>
    %56 = tpu.matmul %55, %53, %cst_18 {dimension_numbers = #tpu.dot_dimension_numbers<[1], [0], [0], [1], [0, 0, 1, 1], [], []>} : vector<24x384xbf16>, vector<384x384xbf16>, vector<24x384xf32> -> vector<24x384xf32>
    %57 = vector.broadcast %3 : vector<1x384xf32> to vector<24x384xf32>
    %58 = arith.addf %56, %57 : vector<24x384xf32>
    %cst_19 = arith.constant 0.000000e+00 : f32
    %59 = vector.broadcast %cst_19 : f32 to vector<24x384xf32>
    %60 = arith.maximumf %58, %59 : vector<24x384xf32>
    %61 = arith.truncf %60 : vector<24x384xf32> to vector<24x384xbf16>
    %cst_20 = arith.constant dense<0.000000e+00> : vector<24x384xf32>
    %62 = tpu.matmul %61, %54, %cst_20 {dimension_numbers = #tpu.dot_dimension_numbers<[1], [0], [0], [1], [0, 0, 1, 1], [], []>} : vector<24x384xbf16>, vector<384x384xbf16>, vector<24x384xf32> -> vector<24x384xf32>
    %63 = vector.broadcast %4 : vector<1x384xf32> to vector<24x384xf32>
    %64 = arith.addf %62, %63 : vector<24x384xf32>
    %65 = arith.addf %31, %64 : vector<24x384xf32>
    %cst_21 = arith.constant dense<0.000000e+00> : vector<24xf32>
    %66 = vector.multi_reduction <add>, %65, %cst_21 [1] : vector<24x384xf32> to vector<24xf32>
    %67 = vector.shape_cast %66 : vector<24xf32> to vector<24x1xf32>
    %cst_22 = arith.constant 3.840000e+02 : f32
    %68 = vector.broadcast %cst_22 : f32 to vector<24x1xf32>
    %69 = arith.divf %67, %68 : vector<24x1xf32>
    %70 = vector.broadcast %69 : vector<24x1xf32> to vector<24x384xf32>
    %71 = arith.subf %65, %70 : vector<24x384xf32>
    %72 = arith.mulf %71, %71 : vector<24x384xf32>
    %cst_23 = arith.constant dense<0.000000e+00> : vector<24xf32>
    %73 = vector.multi_reduction <add>, %72, %cst_23 [1] : vector<24x384xf32> to vector<24xf32>
    %74 = vector.shape_cast %73 : vector<24xf32> to vector<24x1xf32>
    %cst_24 = arith.constant 3.840000e+02 : f32
    %75 = vector.broadcast %cst_24 : f32 to vector<24x1xf32>
    %76 = arith.divf %74, %75 : vector<24x1xf32>
    %cst_25 = arith.constant 9.99999974E-6 : f32
    %77 = vector.broadcast %cst_25 : f32 to vector<24x1xf32>
    %78 = arith.addf %76, %77 : vector<24x1xf32>
    %79 = math.rsqrt %78 : vector<24x1xf32>
    %80 = vector.broadcast %79 : vector<24x1xf32> to vector<24x384xf32>
    %81 = arith.mulf %71, %80 : vector<24x384xf32>
    %82 = vector.broadcast %5 : vector<1x384xf32> to vector<24x384xf32>
    %83 = arith.mulf %81, %82 : vector<24x384xf32>
    %84 = vector.broadcast %6 : vector<1x384xf32> to vector<24x384xf32>
    %85 = arith.addf %83, %84 : vector<24x384xf32>
    %c0_26 = arith.constant 0 : index
    %c0_27 = arith.constant 0 : index
    %86 = vector.load %arg6[%c0_26, %c0_27] : memref<384x384xbf16, #tpu.memory_space<vmem>>, vector<384x384xbf16>
    %c0_28 = arith.constant 0 : index
    %c0_29 = arith.constant 0 : index
    %87 = vector.load %arg7[%c0_28, %c0_29] : memref<384x384xbf16, #tpu.memory_space<vmem>>, vector<384x384xbf16>
    %88 = arith.truncf %52 : vector<24x384xf32> to vector<24x384xbf16>
    %cst_30 = arith.constant dense<0.000000e+00> : vector<24x384xf32>
    %89 = tpu.matmul %88, %86, %cst_30 {dimension_numbers = #tpu.dot_dimension_numbers<[1], [0], [0], [1], [0, 0, 1, 1], [], []>} : vector<24x384xbf16>, vector<384x384xbf16>, vector<24x384xf32> -> vector<24x384xf32>
    %90 = vector.broadcast %7 : vector<1x384xf32> to vector<24x384xf32>
    %91 = arith.addf %89, %90 : vector<24x384xf32>
    %cst_31 = arith.constant 0.000000e+00 : f32
    %92 = vector.broadcast %cst_31 : f32 to vector<24x384xf32>
    %93 = arith.maximumf %91, %92 : vector<24x384xf32>
    %94 = arith.truncf %93 : vector<24x384xf32> to vector<24x384xbf16>
    %cst_32 = arith.constant dense<0.000000e+00> : vector<24x384xf32>
    %95 = tpu.matmul %94, %87, %cst_32 {dimension_numbers = #tpu.dot_dimension_numbers<[1], [0], [0], [1], [0, 0, 1, 1], [], []>} : vector<24x384xbf16>, vector<384x384xbf16>, vector<24x384xf32> -> vector<24x384xf32>
    %96 = vector.broadcast %8 : vector<1x384xf32> to vector<24x384xf32>
    %97 = arith.addf %95, %96 : vector<24x384xf32>
    %98 = arith.addf %52, %97 : vector<24x384xf32>
    %cst_33 = arith.constant dense<0.000000e+00> : vector<24xf32>
    %99 = vector.multi_reduction <add>, %98, %cst_33 [1] : vector<24x384xf32> to vector<24xf32>
    %100 = vector.shape_cast %99 : vector<24xf32> to vector<24x1xf32>
    %cst_34 = arith.constant 3.840000e+02 : f32
    %101 = vector.broadcast %cst_34 : f32 to vector<24x1xf32>
    %102 = arith.divf %100, %101 : vector<24x1xf32>
    %103 = vector.broadcast %102 : vector<24x1xf32> to vector<24x384xf32>
    %104 = arith.subf %98, %103 : vector<24x384xf32>
    %105 = arith.mulf %104, %104 : vector<24x384xf32>
    %cst_35 = arith.constant dense<0.000000e+00> : vector<24xf32>
    %106 = vector.multi_reduction <add>, %105, %cst_35 [1] : vector<24x384xf32> to vector<24xf32>
    %107 = vector.shape_cast %106 : vector<24xf32> to vector<24x1xf32>
    %cst_36 = arith.constant 3.840000e+02 : f32
    %108 = vector.broadcast %cst_36 : f32 to vector<24x1xf32>
    %109 = arith.divf %107, %108 : vector<24x1xf32>
    %cst_37 = arith.constant 9.99999974E-6 : f32
    %110 = vector.broadcast %cst_37 : f32 to vector<24x1xf32>
    %111 = arith.addf %109, %110 : vector<24x1xf32>
    %112 = math.rsqrt %111 : vector<24x1xf32>
    %113 = vector.broadcast %112 : vector<24x1xf32> to vector<24x384xf32>
    %114 = arith.mulf %104, %113 : vector<24x384xf32>
    %115 = vector.broadcast %9 : vector<1x384xf32> to vector<24x384xf32>
    %116 = arith.mulf %114, %115 : vector<24x384xf32>
    %117 = vector.broadcast %10 : vector<1x384xf32> to vector<24x384xf32>
    %118 = arith.addf %116, %117 : vector<24x384xf32>
    %119 = arith.addf %85, %118 : vector<24x384xf32>
    %c0_38 = arith.constant 0 : index
    %c0_39 = arith.constant 0 : index
    %120 = vector.load %arg8[%c0_38, %c0_39] : memref<24x384xf32, #tpu.memory_space<vmem>>, vector<24x384xf32>
    tpu.vector_store %arg8[%c0_38, %c0_39], %119 {strides = array<i32>} : memref<24x384xf32, #tpu.memory_space<vmem>>, vector<24x384xf32>,
    return
  }
  func.func @transform_0(%arg0: i32) -> (i32, i32) {
    %c0_i32 = arith.constant 0 : i32
    %c0_i32_0 = arith.constant 0 : i32
    return %arg0, %c0_i32 : i32, i32
  }
  func.func @transform_1(%arg0: i32) -> (i32, i32) {
    %c0_i32 = arith.constant 0 : i32
    %c0_i32_0 = arith.constant 0 : i32
    return %arg0, %c0_i32 : i32, i32
  }
  func.func @transform_2(%arg0: i32) -> (i32, i32) {
    %c0_i32 = arith.constant 0 : i32
    %c0_i32_0 = arith.constant 0 : i32
    %c0_i32_1 = arith.constant 0 : i32
    return %c0_i32, %c0_i32_0 : i32, i32
  }
  func.func @transform_3(%arg0: i32) -> (i32, i32) {
    %c0_i32 = arith.constant 0 : i32
    %c0_i32_0 = arith.constant 0 : i32
    %c0_i32_1 = arith.constant 0 : i32
    return %c0_i32, %c0_i32_0 : i32, i32
  }
  func.func @transform_4(%arg0: i32) -> (i32, i32) {
    %c0_i32 = arith.constant 0 : i32
    %c0_i32_0 = arith.constant 0 : i32
    %c0_i32_1 = arith.constant 0 : i32
    return %c0_i32, %c0_i32_0 : i32, i32
  }
  func.func @transform_5(%arg0: i32) -> (i32, i32) {
    %c0_i32 = arith.constant 0 : i32
    %c0_i32_0 = arith.constant 0 : i32
    %c0_i32_1 = arith.constant 0 : i32
    return %c0_i32, %c0_i32_0 : i32, i32
  }
  func.func @transform_6(%arg0: i32) -> (i32, i32) {
    %c0_i32 = arith.constant 0 : i32
    %c0_i32_0 = arith.constant 0 : i32
    %c0_i32_1 = arith.constant 0 : i32
    return %c0_i32, %c0_i32_0 : i32, i32
  }
  func.func @transform_7(%arg0: i32) -> (i32, i32) {
    %c0_i32 = arith.constant 0 : i32
    %c0_i32_0 = arith.constant 0 : i32
    return %arg0, %c0_i32 : i32, i32
  }
}

</mosaic_0001>

<llo_original>
// kernel: tpu_custom_call.1
$region0: #{tpu_custom_call.1}
  #allocation0 [shape = 'u32[]', space=smem, size = 0x4, offset = 0x4, fixed_abs, tag = 'smem constant byte address 0x4 - core index']
  #allocation1 [shape = 'u32[72,128]{1,0:T(1,128)}', space=vmem, size = 0x9000, scoped, tag = 'internal scratch']
  %s0 = inlined_call_operand.hbm [shape: f32[24,384], index: 0, kind: input, shape index: {}]
  %s1 = inlined_call_operand.hbm [shape: f32[24,384], index: 1, kind: input, shape index: {}]
  %s2 = inlined_call_operand.hbm [shape: f32[16,384], index: 2, kind: input, shape index: {}]
  %s3 = inlined_call_operand.hbm [shape: bf16[384,384], index: 3, kind: input, shape index: {}]
  %s4 = inlined_call_operand.hbm [shape: bf16[384,384], index: 4, kind: input, shape index: {}]
  %s5 = inlined_call_operand.hbm [shape: bf16[384,384], index: 5, kind: input, shape index: {}]
  %s6 = inlined_call_operand.hbm [shape: bf16[384,384], index: 6, kind: input, shape index: {}]
  %s7 = inlined_call_operand.hbm [shape: f32[24,384], index: 7, kind: output, shape index: {}]
  %s8 = sld [smem:[#allocation0]]
  $region66: #{tpu_custom_call.1} parent=0
    _
  %s10 = ssub.s32 1, %s8
  %s11 = scalar_select 0, %s10, %s8
  $region1: #{tpu_custom_call.1} parent=0
    #allocation2 [shape = 'u8[36864]{0}', space=vmem, size = 0x9000, scoped, tag = 'input window, operand 0, single buffered']
    #allocation3 [shape = 's32[1]{0}', space=sflag, size = 0x4, scoped, tag = 'scoped memory for tpu_custom_call.1']
    #allocation4 [shape = 's32[1]{0}', space=sflag, size = 0x4, scoped, tag = 'scoped memory for tpu_custom_call.1']
    #allocation5 [shape = 'u8[36864]{0}', space=vmem, size = 0x9000, scoped, tag = 'input window, operand 1, single buffered']
    #allocation6 [shape = 's32[1]{0}', space=sflag, size = 0x4, scoped, tag = 'scoped memory for tpu_custom_call.1']
    #allocation7 [shape = 'u8[24576]{0}', space=vmem, size = 0x6000, scoped, tag = 'input window, operand 2, single buffered']
    #allocation8 [shape = 'u8[294912]{0}', space=vmem, size = 0x48000, scoped, tag = 'input window, operand 3, single buffered']
    #allocation9 [shape = 's32[1]{0}', space=sflag, size = 0x4, scoped, tag = 'scoped memory for tpu_custom_call.1']
    #allocation10 [shape = 'u8[294912]{0}', space=vmem, size = 0x48000, scoped, tag = 'input window, operand 4, single buffered']
    #allocation11 [shape = 'u8[294912]{0}', space=vmem, size = 0x48000, scoped, tag = 'input window, operand 5, single buffered']
    #allocation12 [shape = 's32[1]{0}', space=sflag, size = 0x4, scoped, tag = 'scoped memory for tpu_custom_call.1']
    #allocation13 [shape = 'u8[294912]{0}', space=vmem, size = 0x48000, scoped, tag = 'input window, operand 6, single buffered']
    #allocation14 [shape = 'u8[36864]{0}', space=vmem, size = 0x9000, scoped, tag = 'output window, operand 0, single buffered']
    %12 = vsyncpa [#allocation3], 0
    %13 = vsyncpa [#allocation6], 0
    %14 = vsyncpa [#allocation9], 0
    %15 = vsyncpa [#allocation12], 0
    %16 = vsyncpa [#allocation4], 0
    // Predicated region
    $region2: #{tpu_custom_call.1} parent=1 // pred_check
      _
    $region3: #{tpu_custom_call.1} parent=1 // pred_check_branch
      %18 = sbr.rel (0) target = $region5
    $region4: #{tpu_custom_call.1} parent=1 // pred_region
      %20 = vsyncadd [#allocation3], 0
      %s21 = sshll.u32 %s0, 4
      %s22 = int_to_ptr.hbm [resolvable:$true] %s21
      %s23 = sshll.u32 [#allocation2], 4
      %s24 = int_to_ptr.vmem [resolvable:$true] %s23
      %29 = dma.hbm_to_vmem [thread:$0]  %s22, 1152, %s24, [#allocation3], 384, 384, 24
    $region5: #{tpu_custom_call.1} parent=1 // pred_fallthru
      _
    // Predicated region
    $region6: #{tpu_custom_call.1} parent=1 // pred_check
      _
    $region7: #{tpu_custom_call.1} parent=1 // pred_check_branch
      %31 = sbr.rel (0) target = $region9
    $region8: #{tpu_custom_call.1} parent=1 // pred_region
      %33 = vsyncadd [#allocation6], 0
      %s34 = sshll.u32 %s1, 4
      %s35 = int_to_ptr.hbm [resolvable:$true] %s34
      %s36 = sshll.u32 [#allocation5], 4
      %s37 = int_to_ptr.vmem [resolvable:$true] %s36
      %42 = dma.hbm_to_vmem [thread:$0]  %s35, 1152, %s37, [#allocation6], 384, 384, 24
    $region9: #{tpu_custom_call.1} parent=1 // pred_fallthru
      _
    // Predicated region
    $region10: #{tpu_custom_call.1} parent=1 // pred_check
      _
    $region11: #{tpu_custom_call.1} parent=1 // pred_check_branch
      %44 = sbr.rel (0) target = $region13
    $region12: #{tpu_custom_call.1} parent=1 // pred_region
      %46 = vsyncadd [#allocation6], 0
      %s47 = sshll.u32 %s2, 4
      %s48 = int_to_ptr.hbm [resolvable:$true] %s47
      %s49 = sshll.u32 [#allocation7], 4
      %s50 = int_to_ptr.vmem [resolvable:$true] %s49
      %55 = dma.hbm_to_vmem [thread:$0]  %s48, 768, %s50, [#allocation6], 384, 384, 24
    $region13: #{tpu_custom_call.1} parent=1 // pred_fallthru
      _
    // Predicated region
    $region14: #{tpu_custom_call.1} parent=1 // pred_check
      _
    $region15: #{tpu_custom_call.1} parent=1 // pred_check_branch
      %57 = sbr.rel (0) target = $region17
    $region16: #{tpu_custom_call.1} parent=1 // pred_region
      %59 = vsyncadd [#allocation9], 0
      %s60 = sshll.u32 %s3, 4
      %s61 = int_to_ptr.hbm [resolvable:$true] %s60
      %s62 = sshll.u32 [#allocation8], 4
      %s63 = int_to_ptr.vmem [resolvable:$true] %s62
      %68 = dma.hbm_to_vmem [thread:$0]  %s61, 9216, %s63, [#allocation9], 192, 192, 12
    $region17: #{tpu_custom_call.1} parent=1 // pred_fallthru
      _
    // Predicated region
    $region18: #{tpu_custom_call.1} parent=1 // pred_check
      _
    $region19: #{tpu_custom_call.1} parent=1 // pred_check_branch
      %70 = sbr.rel (0) target = $region21
    $region20: #{tpu_custom_call.1} parent=1 // pred_region
      %72 = vsyncadd [#allocation9], 0
      %s73 = sshll.u32 %s4, 4
      %s74 = int_to_ptr.hbm [resolvable:$true] %s73
      %s75 = sshll.u32 [#allocation10], 4
      %s76 = int_to_ptr.vmem [resolvable:$true] %s75
      %81 = dma.hbm_to_vmem [thread:$0]  %s74, 9216, %s76, [#allocation9], 192, 192, 12
    $region21: #{tpu_custom_call.1} parent=1 // pred_fallthru
      _
    // Predicated region
    $region22: #{tpu_custom_call.1} parent=1 // pred_check
      _
    $region23: #{tpu_custom_call.1} parent=1 // pred_check_branch
      %83 = sbr.rel (0) target = $region25
    $region24: #{tpu_custom_call.1} parent=1 // pred_region
      %85 = vsyncadd [#allocation12], 0
      %s86 = sshll.u32 %s5, 4
      %s87 = int_to_ptr.hbm [resolvable:$true] %s86
      %s88 = sshll.u32 [#allocation11], 4
      %s89 = int_to_ptr.vmem [resolvable:$true] %s88
      %94 = dma.hbm_to_vmem [thread:$0]  %s87, 9216, %s89, [#allocation12], 192, 192, 12
    $region25: #{tpu_custom_call.1} parent=1 // pred_fallthru
      _
    // Predicated region
    $region26: #{tpu_custom_call.1} parent=1 // pred_check
      _
    $region27: #{tpu_custom_call.1} parent=1 // pred_check_branch
      %96 = sbr.rel (0) target = $region29
    $region28: #{tpu_custom_call.1} parent=1 // pred_region
      %98 = vsyncadd [#allocation12], 0
      %s99 = sshll.u32 %s6, 4
      %s100 = int_to_ptr.hbm [resolvable:$true] %s99
      %s101 = sshll.u32 [#allocation13], 4
      %s102 = int_to_ptr.vmem [resolvable:$true] %s101
      %107 = dma.hbm_to_vmem [thread:$0]  %s100, 9216, %s102, [#allocation12], 192, 192, 12
    $region29: #{tpu_custom_call.1} parent=1 // pred_fallthru
      _
    // Predicated region
    $region30: #{tpu_custom_call.1} parent=1 // pred_check
      _
    $region31: #{tpu_custom_call.1} parent=1 // pred_check_branch
      %109 = sbr.rel (0) target = $region33
    $region32: #{tpu_custom_call.1} parent=1 // pred_region
      %111 = dma.done [#allocation3], 1152
    $region33: #{tpu_custom_call.1} parent=1 // pred_fallthru
      _
    // Predicated region
    $region34: #{tpu_custom_call.1} parent=1 // pred_check
      _
    $region35: #{tpu_custom_call.1} parent=1 // pred_check_branch
      %113 = sbr.rel (0) target = $region37
    $region36: #{tpu_custom_call.1} parent=1 // pred_region
      %115 = dma.done [#allocation6], 1152
    $region37: #{tpu_custom_call.1} parent=1 // pred_fallthru
      _
    // Predicated region
    $region38: #{tpu_custom_call.1} parent=1 // pred_check
      _
    $region39: #{tpu_custom_call.1} parent=1 // pred_check_branch
      %117 = sbr.rel (0) target = $region41
    $region40: #{tpu_custom_call.1} parent=1 // pred_region
      %119 = dma.done [#allocation6], 768
    $region41: #{tpu_custom_call.1} parent=1 // pred_fallthru
      _
    // Predicated region
    $region42: #{tpu_custom_call.1} parent=1 // pred_check
      _
    $region43: #{tpu_custom_call.1} parent=1 // pred_check_branch
      %121 = sbr.rel (0) target = $region45
    $region44: #{tpu_custom_call.1} parent=1 // pred_region
      %123 = dma.done [#allocation9], 9216
    $region45: #{tpu_custom_call.1} parent=1 // pred_fallthru
      _
    // Predicated region
    $region46: #{tpu_custom_call.1} parent=1 // pred_check
      _
    $region47: #{tpu_custom_call.1} parent=1 // pred_check_branch
      %125 = sbr.rel (0) target = $region49
    $region48: #{tpu_custom_call.1} parent=1 // pred_region
      %127 = dma.done [#allocation9], 9216
    $region49: #{tpu_custom_call.1} parent=1 // pred_fallthru
      _
    // Predicated region
    $region50: #{tpu_custom_call.1} parent=1 // pred_check
      _
    $region51: #{tpu_custom_call.1} parent=1 // pred_check_branch
      %129 = sbr.rel (0) target = $region53
    $region52: #{tpu_custom_call.1} parent=1 // pred_region
      %131 = dma.done [#allocation12], 9216
    $region53: #{tpu_custom_call.1} parent=1 // pred_fallthru
      _
    // Predicated region
    $region54: #{tpu_custom_call.1} parent=1 // pred_check
      _
    $region55: #{tpu_custom_call.1} parent=1 // pred_check_branch
      %133 = sbr.rel (0) target = $region57
    $region56: #{tpu_custom_call.1} parent=1 // pred_region
      %135 = dma.done [#allocation12], 9216
    $region57: #{tpu_custom_call.1} parent=1 // pred_fallthru
      _
    %v136 = vld [vmem:[#allocation7] sm:$0xff]
    %v137 = vld [vmem:[#allocation7 + $0x8] sm:$0xff]
    %v138 = vld [vmem:[#allocation7 + $0x10] sm:$0xff]
    %v139 = vld [vmem:[#allocation7 + $0x18] sm:$0xff]
    %v140 = vld [vmem:[#allocation7 + $0x20] sm:$0xff]
    %v141 = vld [vmem:[#allocation7 + $0x28] sm:$0xff]
    %v142 = vld [vmem:[#allocation2] sm:$0xff]
    %v143 = vld [vmem:[#allocation2 + $0x8] sm:$0xff]
    %v144 = vld [vmem:[#allocation2 + $0x10] sm:$0xff]
    %v145 = vld [vmem:[#allocation2 + $0x18] sm:$0xff]
    %v146 = vld [vmem:[#allocation2 + $0x20] sm:$0xff]
    %v147 = vld [vmem:[#allocation2 + $0x28] sm:$0xff]
    %v148 = vld [vmem:[#allocation2 + $0x30] sm:$0xff]
    %v149 = vld [vmem:[#allocation2 + $0x38] sm:$0xff]
    %v150 = vld [vmem:[#allocation2 + $0x40] sm:$0xff]
    %v151 = vadd.f32 %v142, %v143
    %v152 = vadd.f32 %v151, %v144
    %153 = vadd.xlane.f32.xlu0 %v152
    %v154 = vpop.xlane.xlu0 %153
    %v155 = vadd.f32 %v145, %v146
    %v156 = vadd.f32 %v155, %v147
    %157 = vadd.xlane.f32.xlu0 %v156
    %v158 = vpop.xlane.xlu0 %157
    %v159 = vadd.f32 %v148, %v149
    %v160 = vadd.f32 %v159, %v150
    %161 = vadd.xlane.f32.xlu0 %v160
    %v162 = vpop.xlane.xlu0 %161
    %v163 = vrcp.pop 384.0
    %v164 = vmul.f32 384.0, %v163
    %v165 = vsub.f32 1.0, %v164
    %v166 = vmul.f32 %v163, %v165
    %v167 = vadd.f32 %v163, %v166
    %vm168 = vweird.f32 %v163
    %v169 = vsel %vm168, %v163, %v167
    %v170 = vmul.f32 %v154, %v169
    %v171 = vmul.f32 %v158, %v169
    %v172 = vmul.f32 %v162, %v169
    %v173 = vsub.f32 %v142, %v170
    %v174 = vsub.f32 %v143, %v170
    %v175 = vsub.f32 %v144, %v170
    %v176 = vsub.f32 %v145, %v171
    %v177 = vsub.f32 %v146, %v171
    %v178 = vsub.f32 %v147, %v171
    %v179 = vsub.f32 %v148, %v172
    %v180 = vsub.f32 %v149, %v172
    %v181 = vsub.f32 %v150, %v172
    %v182 = vmul.f32 %v173, %v173
    %v183 = vmul.f32 %v174, %v174
    %v184 = vmul.f32 %v175, %v175
    %v185 = vmul.f32 %v176, %v176
    %v186 = vmul.f32 %v177, %v177
    %v187 = vmul.f32 %v178, %v178
    %v188 = vmul.f32 %v179, %v179
    %v189 = vmul.f32 %v180, %v180
    %v190 = vmul.f32 %v181, %v181
    %v191 = vadd.f32 %v182, %v183
    %v192 = vadd.f32 %v191, %v184
    %193 = vadd.xlane.f32.xlu0 %v192
    %v194 = vpop.xlane.xlu0 %193
    %v195 = vadd.f32 %v185, %v186
    %v196 = vadd.f32 %v195, %v187
    %197 = vadd.xlane.f32.xlu0 %v196
    %v198 = vpop.xlane.xlu0 %197
    %v199 = vadd.f32 %v188, %v189
    %v200 = vadd.f32 %v199, %v190
    %201 = vadd.xlane.f32.xlu0 %v200
    %v202 = vpop.xlane.xlu0 %201
    %v203 = vmul.f32 %v194, %v169
    %v204 = vmul.f32 %v198, %v169
    %v205 = vmul.f32 %v202, %v169
    %v206 = vadd.f32 %v203, 1e-05
    %v207 = vadd.f32 %v204, 1e-05
    %v208 = vadd.f32 %v205, 1e-05
    %v209 = vrsqrt.pop %v206
    %v210 = vmul.f32 %v209, %v206
    %v211 = vmul.f32 %v210, %v209
    %v212 = vmul.f32 0.5, %v211
    %v213 = vsub.f32 1.5, %v212
    %v214 = vmul.f32 %v209, %v213
    %vm215 = vweird.f32 %v206
    %vm216 = vweird.f32 %v209
    %vm217 = vmor %vm215, %vm216
    %v218 = vsel %vm217, %v209, %v214
    %v219 = vrsqrt.pop %v207
    %v220 = vmul.f32 %v219, %v207
    %v221 = vmul.f32 %v220, %v219
    %v222 = vmul.f32 0.5, %v221
    %v223 = vsub.f32 1.5, %v222
    %v224 = vmul.f32 %v219, %v223
    %vm225 = vweird.f32 %v207
    %vm226 = vweird.f32 %v219
    %vm227 = vmor %vm225, %vm226
    %v228 = vsel %vm227, %v219, %v224
    %v229 = vrsqrt.pop %v208
    %v230 = vmul.f32 %v229, %v208
    %v231 = vmul.f32 %v230, %v229
    %v232 = vmul.f32 0.5, %v231
    %v233 = vsub.f32 1.5, %v232
    %v234 = vmul.f32 %v229, %v233
    %vm235 = vweird.f32 %v208
    %vm236 = vweird.f32 %v229
    %vm237 = vmor %vm235, %vm236
    %v238 = vsel %vm237, %v229, %v234
    %v239 = vmul.f32 %v173, %v218
    %v240 = vmul.f32 %v174, %v218
    %v241 = vmul.f32 %v175, %v218
    %v242 = vmul.f32 %v176, %v228
    %v243 = vmul.f32 %v177, %v228
    %v244 = vmul.f32 %v178, %v228
    %v245 = vmul.f32 %v179, %v238
    %v246 = vmul.f32 %v180, %v238
    %v247 = vmul.f32 %v181, %v238
    %v248 = vperm.slane %v136, 0
    %v249 = vperm.slane %v137, 0
    %v250 = vperm.slane %v138, 0
    %v251 = vmul.f32 %v239, %v248
    %v252 = vmul.f32 %v240, %v249
    %v253 = vmul.f32 %v241, %v250
    %v254 = vmul.f32 %v242, %v248
    %v255 = vmul.f32 %v243, %v249
    %v256 = vmul.f32 %v244, %v250
    %v257 = vmul.f32 %v245, %v248
    %v258 = vmul.f32 %v246, %v249
    %v259 = vmul.f32 %v247, %v250
    %v260 = vperm.slane %v136, 1
    %v261 = vperm.slane %v137, 1
    %v262 = vperm.slane %v138, 1
    %v263 = vadd.f32 %v251, %v260
    %v264 = vadd.f32 %v252, %v261
    %v265 = vadd.f32 %v253, %v262
    %v266 = vadd.f32 %v254, %v260
    %v267 = vadd.f32 %v255, %v261
    %v268 = vadd.f32 %v256, %v262
    %v269 = vadd.f32 %v257, %v260
    %v270 = vadd.f32 %v258, %v261
    %v271 = vadd.f32 %v259, %v262
    %v272 = vld [vmem:[#allocation5] sm:$0xff]
    %v273 = vld [vmem:[#allocation5 + $0x8] sm:$0xff]
    %v274 = vld [vmem:[#allocation5 + $0x10] sm:$0xff]
    %v275 = vld [vmem:[#allocation5 + $0x18] sm:$0xff]
    %v276 = vld [vmem:[#allocation5 + $0x20] sm:$0xff]
    %v277 = vld [vmem:[#allocation5 + $0x28] sm:$0xff]
    %v278 = vld [vmem:[#allocation5 + $0x30] sm:$0xff]
    %v279 = vld [vmem:[#allocation5 + $0x38] sm:$0xff]
    %v280 = vld [vmem:[#allocation5 + $0x40] sm:$0xff]
    %v281 = vadd.f32 %v272, %v273
    %v282 = vadd.f32 %v281, %v274
    %283 = vadd.xlane.f32.xlu0 %v282
    %v284 = vpop.xlane.xlu0 %283
    %v285 = vadd.f32 %v275, %v276
    %v286 = vadd.f32 %v285, %v277
    %287 = vadd.xlane.f32.xlu0 %v286
    %v288 = vpop.xlane.xlu0 %287
    %v289 = vadd.f32 %v278, %v279
    %v290 = vadd.f32 %v289, %v280
    %291 = vadd.xlane.f32.xlu0 %v290
    %v292 = vpop.xlane.xlu0 %291
    %v293 = vmul.f32 %v284, %v169
    %v294 = vmul.f32 %v288, %v169
    %v295 = vmul.f32 %v292, %v169
    %v296 = vsub.f32 %v272, %v293
    %v297 = vsub.f32 %v273, %v293
    %v298 = vsub.f32 %v274, %v293
    %v299 = vsub.f32 %v275, %v294
    %v300 = vsub.f32 %v276, %v294
    %v301 = vsub.f32 %v277, %v294
    %v302 = vsub.f32 %v278, %v295
    %v303 = vsub.f32 %v279, %v295
    %v304 = vsub.f32 %v280, %v295
    %v305 = vmul.f32 %v296, %v296
    %v306 = vmul.f32 %v297, %v297
    %v307 = vmul.f32 %v298, %v298
    %v308 = vmul.f32 %v299, %v299
    %v309 = vmul.f32 %v300, %v300
    %v310 = vmul.f32 %v301, %v301
    %v311 = vmul.f32 %v302, %v302
    %v312 = vmul.f32 %v303, %v303
    %v313 = vmul.f32 %v304, %v304
    %v314 = vadd.f32 %v305, %v306
    %v315 = vadd.f32 %v314, %v307
    %316 = vadd.xlane.f32.xlu0 %v315
    %v317 = vpop.xlane.xlu0 %316
    %v318 = vadd.f32 %v308, %v309
    %v319 = vadd.f32 %v318, %v310
    %320 = vadd.xlane.f32.xlu0 %v319
    %v321 = vpop.xlane.xlu0 %320
    %v322 = vadd.f32 %v311, %v312
    %v323 = vadd.f32 %v322, %v313
    %324 = vadd.xlane.f32.xlu0 %v323
    %v325 = vpop.xlane.xlu0 %324
    %v326 = vmul.f32 %v317, %v169
    %v327 = vmul.f32 %v321, %v169
    %v328 = vmul.f32 %v325, %v169
    %v329 = vadd.f32 %v326, 1e-05
    %v330 = vadd.f32 %v327, 1e-05
    %v331 = vadd.f32 %v328, 1e-05
    %v332 = vrsqrt.pop %v329
    %v333 = vmul.f32 %v332, %v329
    %v334 = vmul.f32 %v333, %v332
    %v335 = vmul.f32 0.5, %v334
    %v336 = vsub.f32 1.5, %v335
    %v337 = vmul.f32 %v332, %v336
    %vm338 = vweird.f32 %v329
    %vm339 = vweird.f32 %v332
    %vm340 = vmor %vm338, %vm339
    %v341 = vsel %vm340, %v332, %v337
    %v342 = vrsqrt.pop %v330
    %v343 = vmul.f32 %v342, %v330
    %v344 = vmul.f32 %v343, %v342
    %v345 = vmul.f32 0.5, %v344
    %v346 = vsub.f32 1.5, %v345
    %v347 = vmul.f32 %v342, %v346
    %vm348 = vweird.f32 %v330
    %vm349 = vweird.f32 %v342
    %vm350 = vmor %vm348, %vm349
    %v351 = vsel %vm350, %v342, %v347
    %v352 = vrsqrt.pop %v331
    %v353 = vmul.f32 %v352, %v331
    %v354 = vmul.f32 %v353, %v352
    %v355 = vmul.f32 0.5, %v354
    %v356 = vsub.f32 1.5, %v355
    %v357 = vmul.f32 %v352, %v356
    %vm358 = vweird.f32 %v331
    %vm359 = vweird.f32 %v352
    %vm360 = vmor %vm358, %vm359
    %v361 = vsel %vm360, %v352, %v357
    %v362 = vmul.f32 %v296, %v341
    %v363 = vmul.f32 %v297, %v341
    %v364 = vmul.f32 %v298, %v341
    %v365 = vmul.f32 %v299, %v351
    %v366 = vmul.f32 %v300, %v351
    %v367 = vmul.f32 %v301, %v351
    %v368 = vmul.f32 %v302, %v361
    %v369 = vmul.f32 %v303, %v361
    %v370 = vmul.f32 %v304, %v361
    %v371 = vmul.f32 %v362, %v248
    %v372 = vmul.f32 %v363, %v249
    %v373 = vmul.f32 %v364, %v250
    %v374 = vmul.f32 %v365, %v248
    %v375 = vmul.f32 %v366, %v249
    %v376 = vmul.f32 %v367, %v250
    %v377 = vmul.f32 %v368, %v248
    %v378 = vmul.f32 %v369, %v249
    %v379 = vmul.f32 %v370, %v250
    %v380 = vadd.f32 %v371, %v260
    %v381 = vadd.f32 %v372, %v261
    %v382 = vadd.f32 %v373, %v262
    %v383 = vadd.f32 %v374, %v260
    %v384 = vadd.f32 %v375, %v261
    %v385 = vadd.f32 %v376, %v262
    %v386 = vadd.f32 %v377, %v260
    %v387 = vadd.f32 %v378, %v261
    %v388 = vadd.f32 %v379, %v262
    %v389 = vld [vmem:[#allocation8] sm:$0xff]
    %v390 = vld [vmem:[#allocation8 + $0x8] sm:$0xf]
    %v391 = vld [vmem:[#allocation8 + $0xc] sm:$0xff]
    %v392 = vld [vmem:[#allocation8 + $0x14] sm:$0xf]
    %v393 = vld [vmem:[#allocation8 + $0x18] sm:$0xff]
    %v394 = vld [vmem:[#allocation8 + $0x20] sm:$0xf]
    %v395 = vld [vmem:[#allocation8 + $0x24] sm:$0xff]
    %v396 = vld [vmem:[#allocation8 + $0x2c] sm:$0xf]
    %v397 = vld [vmem:[#allocation8 + $0x30] sm:$0xff]
    %v398 = vld [vmem:[#allocation8 + $0x38] sm:$0xf]
    %v399 = vld [vmem:[#allocation8 + $0x3c] sm:$0xff]
    %v400 = vld [vmem:[#allocation8 + $0x44] sm:$0xf]
    %v401 = vld [vmem:[#allocation8 + $0x48] sm:$0xff]
    %v402 = vld [vmem:[#allocation8 + $0x50] sm:$0xf]
    %v403 = vld [vmem:[#allocation8 + $0x54] sm:$0xff]
    %v404 = vld [vmem:[#allocation8 + $0x5c] sm:$0xf]
    %v405 = vld [vmem:[#allocation8 + $0x60] sm:$0xff]
    %v406 = vld [vmem:[#allocation8 + $0x68] sm:$0xf]
    %v407 = vld [vmem:[#allocation8 + $0x6c] sm:$0xff]
    %v408 = vld [vmem:[#allocation8 + $0x74] sm:$0xf]
    %v409 = vld [vmem:[#allocation8 + $0x78] sm:$0xff]
    %v410 = vld [vmem:[#allocation8 + $0x80] sm:$0xf]
    %v411 = vld [vmem:[#allocation8 + $0x84] sm:$0xff]
    %v412 = vld [vmem:[#allocation8 + $0x8c] sm:$0xf]
    %v413 = vld [vmem:[#allocation8 + $0x90] sm:$0xff]
    %v414 = vld [vmem:[#allocation8 + $0x98] sm:$0xf]
    %v415 = vld [vmem:[#allocation8 + $0x9c] sm:$0xff]
    %v416 = vld [vmem:[#allocation8 + $0xa4] sm:$0xf]
    %v417 = vld [vmem:[#allocation8 + $0xa8] sm:$0xff]
    %v418 = vld [vmem:[#allocation8 + $0xb0] sm:$0xf]
    %v419 = vld [vmem:[#allocation8 + $0xb4] sm:$0xff]
    %v420 = vld [vmem:[#allocation8 + $0xbc] sm:$0xf]
    %v421 = vld [vmem:[#allocation8 + $0xc0] sm:$0xff]
    %v422 = vld [vmem:[#allocation8 + $0xc8] sm:$0xf]
    %v423 = vld [vmem:[#allocation8 + $0xcc] sm:$0xff]
    %v424 = vld [vmem:[#allocation8 + $0xd4] sm:$0xf]
    %v425 = vld [vmem:[#allocation8 + $0xd8] sm:$0xff]
    %v426 = vld [vmem:[#allocation8 + $0xe0] sm:$0xf]
    %v427 = vld [vmem:[#allocation8 + $0xe4] sm:$0xff]
    %v428 = vld [vmem:[#allocation8 + $0xec] sm:$0xf]
    %v429 = vld [vmem:[#allocation8 + $0xf0] sm:$0xff]
    %v430 = vld [vmem:[#allocation8 + $0xf8] sm:$0xf]
    %v431 = vld [vmem:[#allocation8 + $0xfc] sm:$0xff]
    %v432 = vld [vmem:[#allocation8 + $0x104] sm:$0xf]
    %v433 = vld [vmem:[#allocation8 + $0x108] sm:$0xff]
    %v434 = vld [vmem:[#allocation8 + $0x110] sm:$0xf]
    %v435 = vld [vmem:[#allocation8 + $0x114] sm:$0xff]
    %v436 = vld [vmem:[#allocation8 + $0x11c] sm:$0xf]
    %v437 = vld [vmem:[#allocation8 + $0x120] sm:$0xff]
    %v438 = vld [vmem:[#allocation8 + $0x128] sm:$0xf]
    %v439 = vld [vmem:[#allocation8 + $0x12c] sm:$0xff]
    %v440 = vld [vmem:[#allocation8 + $0x134] sm:$0xf]
    %v441 = vld [vmem:[#allocation8 + $0x138] sm:$0xff]
    %v442 = vld [vmem:[#allocation8 + $0x140] sm:$0xf]
    %v443 = vld [vmem:[#allocation8 + $0x144] sm:$0xff]
    %v444 = vld [vmem:[#allocation8 + $0x14c] sm:$0xf]
    %v445 = vld [vmem:[#allocation8 + $0x150] sm:$0xff]
    %v446 = vld [vmem:[#allocation8 + $0x158] sm:$0xf]
    %v447 = vld [vmem:[#allocation8 + $0x15c] sm:$0xff]
    %v448 = vld [vmem:[#allocation8 + $0x164] sm:$0xf]
    %v449 = vld [vmem:[#allocation8 + $0x168] sm:$0xff]
    %v450 = vld [vmem:[#allocation8 + $0x170] sm:$0xf]
    %v451 = vld [vmem:[#allocation8 + $0x174] sm:$0xff]
    %v452 = vld [vmem:[#allocation8 + $0x17c] sm:$0xf]
    %v453 = vld [vmem:[#allocation8 + $0x180] sm:$0xff]
    %v454 = vld [vmem:[#allocation8 + $0x188] sm:$0xf]
    %v455 = vld [vmem:[#allocation8 + $0x18c] sm:$0xff]
    %v456 = vld [vmem:[#allocation8 + $0x194] sm:$0xf]
    %v457 = vld [vmem:[#allocation8 + $0x198] sm:$0xff]
    %v458 = vld [vmem:[#allocation8 + $0x1a0] sm:$0xf]
    %v459 = vld [vmem:[#allocation8 + $0x1a4] sm:$0xff]
    %v460 = vld [vmem:[#allocation8 + $0x1ac] sm:$0xf]
    %v461 = vld [vmem:[#allocation8 + $0x1b0] sm:$0xff]
    %v462 = vld [vmem:[#allocation8 + $0x1b8] sm:$0xf]
    %v463 = vld [vmem:[#allocation8 + $0x1bc] sm:$0xff]
    %v464 = vld [vmem:[#allocation8 + $0x1c4] sm:$0xf]
    %v465 = vld [vmem:[#allocation8 + $0x1c8] sm:$0xff]
    %v466 = vld [vmem:[#allocation8 + $0x1d0] sm:$0xf]
    %v467 = vld [vmem:[#allocation8 + $0x1d4] sm:$0xff]
    %v468 = vld [vmem:[#allocation8 + $0x1dc] sm:$0xf]
    %v469 = vld [vmem:[#allocation8 + $0x1e0] sm:$0xff]
    %v470 = vld [vmem:[#allocation8 + $0x1e8] sm:$0xf]
    %v471 = vld [vmem:[#allocation8 + $0x1ec] sm:$0xff]
    %v472 = vld [vmem:[#allocation8 + $0x1f4] sm:$0xf]
    %v473 = vld [vmem:[#allocation8 + $0x1f8] sm:$0xff]
    %v474 = vld [vmem:[#allocation8 + $0x200] sm:$0xf]
    %v475 = vld [vmem:[#allocation8 + $0x204] sm:$0xff]
    %v476 = vld [vmem:[#allocation8 + $0x20c] sm:$0xf]
    %v477 = vld [vmem:[#allocation8 + $0x210] sm:$0xff]
    %v478 = vld [vmem:[#allocation8 + $0x218] sm:$0xf]
    %v479 = vld [vmem:[#allocation8 + $0x21c] sm:$0xff]
    %v480 = vld [vmem:[#allocation8 + $0x224] sm:$0xf]
    %v481 = vld [vmem:[#allocation8 + $0x228] sm:$0xff]
    %v482 = vld [vmem:[#allocation8 + $0x230] sm:$0xf]
    %v483 = vld [vmem:[#allocation8 + $0x234] sm:$0xff]
    %v484 = vld [vmem:[#allocation8 + $0x23c] sm:$0xf]
    %v485 = vld [vmem:[#allocation10] sm:$0xff]
    %v486 = vld [vmem:[#allocation10 + $0x8] sm:$0xf]
    %v487 = vld [vmem:[#allocation10 + $0xc] sm:$0xff]
    %v488 = vld [vmem:[#allocation10 + $0x14] sm:$0xf]
    %v489 = vld [vmem:[#allocation10 + $0x18] sm:$0xff]
    %v490 = vld [vmem:[#allocation10 + $0x20] sm:$0xf]
    %v491 = vld [vmem:[#allocation10 + $0x24] sm:$0xff]
    %v492 = vld [vmem:[#allocation10 + $0x2c] sm:$0xf]
    %v493 = vld [vmem:[#allocation10 + $0x30] sm:$0xff]
    %v494 = vld [vmem:[#allocation10 + $0x38] sm:$0xf]
    %v495 = vld [vmem:[#allocation10 + $0x3c] sm:$0xff]
    %v496 = vld [vmem:[#allocation10 + $0x44] sm:$0xf]
    %v497 = vld [vmem:[#allocation10 + $0x48] sm:$0xff]
    %v498 = vld [vmem:[#allocation10 + $0x50] sm:$0xf]
    %v499 = vld [vmem:[#allocation10 + $0x54] sm:$0xff]
    %v500 = vld [vmem:[#allocation10 + $0x5c] sm:$0xf]
    %v501 = vld [vmem:[#allocation10 + $0x60] sm:$0xff]
    %v502 = vld [vmem:[#allocation10 + $0x68] sm:$0xf]
    %v503 = vld [vmem:[#allocation10 + $0x6c] sm:$0xff]
    %v504 = vld [vmem:[#allocation10 + $0x74] sm:$0xf]
    %v505 = vld [vmem:[#allocation10 + $0x78] sm:$0xff]
    %v506 = vld [vmem:[#allocation10 + $0x80] sm:$0xf]
    %v507 = vld [vmem:[#allocation10 + $0x84] sm:$0xff]
    %v508 = vld [vmem:[#allocation10 + $0x8c] sm:$0xf]
    %v509 = vld [vmem:[#allocation10 + $0x90] sm:$0xff]
    %v510 = vld [vmem:[#allocation10 + $0x98] sm:$0xf]
    %v511 = vld [vmem:[#allocation10 + $0x9c] sm:$0xff]
    %v512 = vld [vmem:[#allocation10 + $0xa4] sm:$0xf]
    %v513 = vld [vmem:[#allocation10 + $0xa8] sm:$0xff]
    %v514 = vld [vmem:[#allocation10 + $0xb0] sm:$0xf]
    %v515 = vld [vmem:[#allocation10 + $0xb4] sm:$0xff]
    %v516 = vld [vmem:[#allocation10 + $0xbc] sm:$0xf]
    %v517 = vld [vmem:[#allocation10 + $0xc0] sm:$0xff]
    %v518 = vld [vmem:[#allocation10 + $0xc8] sm:$0xf]
    %v519 = vld [vmem:[#allocation10 + $0xcc] sm:$0xff]
    %v520 = vld [vmem:[#allocation10 + $0xd4] sm:$0xf]
    %v521 = vld [vmem:[#allocation10 + $0xd8] sm:$0xff]
    %v522 = vld [vmem:[#allocation10 + $0xe0] sm:$0xf]
    %v523 = vld [vmem:[#allocation10 + $0xe4] sm:$0xff]
    %v524 = vld [vmem:[#allocation10 + $0xec] sm:$0xf]
    %v525 = vld [vmem:[#allocation10 + $0xf0] sm:$0xff]
    %v526 = vld [vmem:[#allocation10 + $0xf8] sm:$0xf]
    %v527 = vld [vmem:[#allocation10 + $0xfc] sm:$0xff]
    %v528 = vld [vmem:[#allocation10 + $0x104] sm:$0xf]
    %v529 = vld [vmem:[#allocation10 + $0x108] sm:$0xff]
    %v530 = vld [vmem:[#allocation10 + $0x110] sm:$0xf]
    %v531 = vld [vmem:[#allocation10 + $0x114] sm:$0xff]
    %v532 = vld [vmem:[#allocation10 + $0x11c] sm:$0xf]
    %v533 = vld [vmem:[#allocation10 + $0x120] sm:$0xff]
    %v534 = vld [vmem:[#allocation10 + $0x128] sm:$0xf]
    %v535 = vld [vmem:[#allocation10 + $0x12c] sm:$0xff]
    %v536 = vld [vmem:[#allocation10 + $0x134] sm:$0xf]
    %v537 = vld [vmem:[#allocation10 + $0x138] sm:$0xff]
    %v538 = vld [vmem:[#allocation10 + $0x140] sm:$0xf]
    %v539 = vld [vmem:[#allocation10 + $0x144] sm:$0xff]
    %v540 = vld [vmem:[#allocation10 + $0x14c] sm:$0xf]
    %v541 = vld [vmem:[#allocation10 + $0x150] sm:$0xff]
    %v542 = vld [vmem:[#allocation10 + $0x158] sm:$0xf]
    %v543 = vld [vmem:[#allocation10 + $0x15c] sm:$0xff]
    %v544 = vld [vmem:[#allocation10 + $0x164] sm:$0xf]
    %v545 = vld [vmem:[#allocation10 + $0x168] sm:$0xff]
    %v546 = vld [vmem:[#allocation10 + $0x170] sm:$0xf]
    %v547 = vld [vmem:[#allocation10 + $0x174] sm:$0xff]
    %v548 = vld [vmem:[#allocation10 + $0x17c] sm:$0xf]
    %v549 = vld [vmem:[#allocation10 + $0x180] sm:$0xff]
    %v550 = vld [vmem:[#allocation10 + $0x188] sm:$0xf]
    %v551 = vld [vmem:[#allocation10 + $0x18c] sm:$0xff]
    %v552 = vld [vmem:[#allocation10 + $0x194] sm:$0xf]
    %v553 = vld [vmem:[#allocation10 + $0x198] sm:$0xff]
    %v554 = vld [vmem:[#allocation10 + $0x1a0] sm:$0xf]
    %v555 = vld [vmem:[#allocation10 + $0x1a4] sm:$0xff]
    %v556 = vld [vmem:[#allocation10 + $0x1ac] sm:$0xf]
    %v557 = vld [vmem:[#allocation10 + $0x1b0] sm:$0xff]
    %v558 = vld [vmem:[#allocation10 + $0x1b8] sm:$0xf]
    %v559 = vld [vmem:[#allocation10 + $0x1bc] sm:$0xff]
    %v560 = vld [vmem:[#allocation10 + $0x1c4] sm:$0xf]
    %v561 = vld [vmem:[#allocation10 + $0x1c8] sm:$0xff]
    %v562 = vld [vmem:[#allocation10 + $0x1d0] sm:$0xf]
    %v563 = vld [vmem:[#allocation10 + $0x1d4] sm:$0xff]
    %v564 = vld [vmem:[#allocation10 + $0x1dc] sm:$0xf]
    %v565 = vld [vmem:[#allocation10 + $0x1e0] sm:$0xff]
    %v566 = vld [vmem:[#allocation10 + $0x1e8] sm:$0xf]
    %v567 = vld [vmem:[#allocation10 + $0x1ec] sm:$0xff]
    %v568 = vld [vmem:[#allocation10 + $0x1f4] sm:$0xf]
    %v569 = vld [vmem:[#allocation10 + $0x1f8] sm:$0xff]
    %v570 = vld [vmem:[#allocation10 + $0x200] sm:$0xf]
    %v571 = vld [vmem:[#allocation10 + $0x204] sm:$0xff]
    %v572 = vld [vmem:[#allocation10 + $0x20c] sm:$0xf]
    %v573 = vld [vmem:[#allocation10 + $0x210] sm:$0xff]
    %v574 = vld [vmem:[#allocation10 + $0x218] sm:$0xf]
    %v575 = vld [vmem:[#allocation10 + $0x21c] sm:$0xff]
    %v576 = vld [vmem:[#allocation10 + $0x224] sm:$0xf]
    %v577 = vld [vmem:[#allocation10 + $0x228] sm:$0xff]
    %v578 = vld [vmem:[#allocation10 + $0x230] sm:$0xf]
    %v579 = vld [vmem:[#allocation10 + $0x234] sm:$0xff]
    %v580 = vld [vmem:[#allocation10 + $0x23c] sm:$0xf]
    %v581 = vpack.c.bf16 %v266, %v263
    %v582 = vpack.c.bf16 %v267, %v264
    %v583 = vpack.c.bf16 %v268, %v265
    %v584 = vpack.c.bf16 %v269, %v269
    %v585 = vpack.c.bf16 %v270, %v270
    %v586 = vpack.c.bf16 %v271, %v271
    %v587 = vperm.slane %v136, 2
    %v588 = vperm.slane %v137, 2
    %v589 = vperm.slane %v138, 2
    %v686 = vunpack.c.l.b16 %v389
    %v687 = vunpack.c.h.b16 %v389
    %v688 = vunpack.c.l.b16 %v390
    %v689 = vunpack.c.l.b16 %v391
    %v690 = vunpack.c.h.b16 %v391
    %v691 = vunpack.c.l.b16 %v392
    %v692 = vunpack.c.l.b16 %v393
    %v693 = vunpack.c.h.b16 %v393
    %v694 = vunpack.c.l.b16 %v394
    %v695 = vunpack.c.l.b16 %v395
    %v696 = vunpack.c.h.b16 %v395
    %v697 = vunpack.c.l.b16 %v396
    %v698 = vunpack.c.l.b16 %v397
    %v699 = vunpack.c.h.b16 %v397
    %v700 = vunpack.c.l.b16 %v398
    %v701 = vunpack.c.l.b16 %v399
    %v702 = vunpack.c.h.b16 %v399
    %v703 = vunpack.c.l.b16 %v400
    %v704 = vunpack.c.l.b16 %v401
    %v705 = vunpack.c.h.b16 %v401
    %v706 = vunpack.c.l.b16 %v402
    %v707 = vunpack.c.l.b16 %v403
    %v708 = vunpack.c.h.b16 %v403
    %v709 = vunpack.c.l.b16 %v404
    %v710 = vunpack.c.l.b16 %v405
    %v711 = vunpack.c.h.b16 %v405
    %v712 = vunpack.c.l.b16 %v406
    %v713 = vunpack.c.l.b16 %v407
    %v714 = vunpack.c.h.b16 %v407
    %v715 = vunpack.c.l.b16 %v408
    %v716 = vunpack.c.l.b16 %v409
    %v717 = vunpack.c.h.b16 %v409
    %v718 = vunpack.c.l.b16 %v410
    %v719 = vunpack.c.l.b16 %v411
    %v720 = vunpack.c.h.b16 %v411
    %v721 = vunpack.c.l.b16 %v412
    %v722 = vunpack.c.l.b16 %v413
    %v723 = vunpack.c.h.b16 %v413
    %v724 = vunpack.c.l.b16 %v414
    %v725 = vunpack.c.l.b16 %v415
    %v726 = vunpack.c.h.b16 %v415
    %v727 = vunpack.c.l.b16 %v416
    %v728 = vunpack.c.l.b16 %v417
    %v729 = vunpack.c.h.b16 %v417
    %v730 = vunpack.c.l.b16 %v418
    %v731 = vunpack.c.l.b16 %v419
    %v732 = vunpack.c.h.b16 %v419
    %v733 = vunpack.c.l.b16 %v420
    %v734 = vunpack.c.l.b16 %v421
    %v735 = vunpack.c.h.b16 %v421
    %v736 = vunpack.c.l.b16 %v422
    %v737 = vunpack.c.l.b16 %v423
    %v738 = vunpack.c.h.b16 %v423
    %v739 = vunpack.c.l.b16 %v424
    %v740 = vunpack.c.l.b16 %v425
    %v741 = vunpack.c.h.b16 %v425
    %v742 = vunpack.c.l.b16 %v426
    %v743 = vunpack.c.l.b16 %v427
    %v744 = vunpack.c.h.b16 %v427
    %v745 = vunpack.c.l.b16 %v428
    %v746 = vunpack.c.l.b16 %v429
    %v747 = vunpack.c.h.b16 %v429
    %v748 = vunpack.c.l.b16 %v430
    %v749 = vunpack.c.l.b16 %v431
    %v750 = vunpack.c.h.b16 %v431
    %v751 = vunpack.c.l.b16 %v432
    %v752 = vunpack.c.l.b16 %v433
    %v753 = vunpack.c.h.b16 %v433
    %v754 = vunpack.c.l.b16 %v434
    %v755 = vunpack.c.l.b16 %v435
    %v756 = vunpack.c.h.b16 %v435
    %v757 = vunpack.c.l.b16 %v436
    %v758 = vunpack.c.l.b16 %v437
    %v759 = vunpack.c.h.b16 %v437
    %v760 = vunpack.c.l.b16 %v438
    %v761 = vunpack.c.l.b16 %v439
    %v762 = vunpack.c.h.b16 %v439
    %v763 = vunpack.c.l.b16 %v440
    %v764 = vunpack.c.l.b16 %v441
    %v765 = vunpack.c.h.b16 %v441
    %v766 = vunpack.c.l.b16 %v442
    %v767 = vunpack.c.l.b16 %v443
    %v768 = vunpack.c.h.b16 %v443
    %v769 = vunpack.c.l.b16 %v444
    %v770 = vunpack.c.l.b16 %v445
    %v771 = vunpack.c.h.b16 %v445
    %v772 = vunpack.c.l.b16 %v446
    %v773 = vunpack.c.l.b16 %v447
    %v774 = vunpack.c.h.b16 %v447
    %v775 = vunpack.c.l.b16 %v448
    %v776 = vunpack.c.l.b16 %v449
    %v777 = vunpack.c.h.b16 %v449
    %v778 = vunpack.c.l.b16 %v450
    %v779 = vunpack.c.l.b16 %v451
    %v780 = vunpack.c.h.b16 %v451
    %v781 = vunpack.c.l.b16 %v452
    %v782 = vunpack.c.l.b16 %v453
    %v783 = vunpack.c.h.b16 %v453
    %v784 = vunpack.c.l.b16 %v454
    %v785 = vunpack.c.l.b16 %v455
    %v786 = vunpack.c.h.b16 %v455
    %v787 = vunpack.c.l.b16 %v456
    %v788 = vunpack.c.l.b16 %v457
    %v789 = vunpack.c.h.b16 %v457
    %v790 = vunpack.c.l.b16 %v458
    %v791 = vunpack.c.l.b16 %v459
    %v792 = vunpack.c.h.b16 %v459
    %v793 = vunpack.c.l.b16 %v460
    %v794 = vunpack.c.l.b16 %v461
    %v795 = vunpack.c.h.b16 %v461
    %v796 = vunpack.c.l.b16 %v462
    %v797 = vunpack.c.l.b16 %v463
    %v798 = vunpack.c.h.b16 %v463
    %v799 = vunpack.c.l.b16 %v464
    %v800 = vunpack.c.l.b16 %v465
    %v801 = vunpack.c.h.b16 %v465
    %v802 = vunpack.c.l.b16 %v466
    %v803 = vunpack.c.l.b16 %v467
    %v804 = vunpack.c.h.b16 %v467
    %v805 = vunpack.c.l.b16 %v468
    %v806 = vunpack.c.l.b16 %v469
    %v807 = vunpack.c.h.b16 %v469
    %v808 = vunpack.c.l.b16 %v470
    %v809 = vunpack.c.l.b16 %v471
    %v810 = vunpack.c.h.b16 %v471
    %v811 = vunpack.c.l.b16 %v472
    %v812 = vunpack.c.l.b16 %v473
    %v813 = vunpack.c.h.b16 %v473
    %v814 = vunpack.c.l.b16 %v474
    %v815 = vunpack.c.l.b16 %v475
    %v816 = vunpack.c.h.b16 %v475
    %v817 = vunpack.c.l.b16 %v476
    %v818 = vunpack.c.l.b16 %v477
    %v819 = vunpack.c.h.b16 %v477
    %v820 = vunpack.c.l.b16 %v478
    %v821 = vunpack.c.l.b16 %v479
    %v822 = vunpack.c.h.b16 %v479
    %v823 = vunpack.c.l.b16 %v480
    %v824 = vunpack.c.l.b16 %v481
    %v825 = vunpack.c.h.b16 %v481
    %v826 = vunpack.c.l.b16 %v482
    %v827 = vunpack.c.l.b16 %v483
    %v828 = vunpack.c.h.b16 %v483
    %v829 = vunpack.c.l.b16 %v484
    %v830 = vpack.c.b16 %v689, %v686
    %v831 = vpack.c.b16 %v690, %v687
    %v832 = vpack.c.b16 %v691, %v688
    %v833 = vpack.c.b16 %v695, %v692
    %v834 = vpack.c.b16 %v696, %v693
    %v835 = vpack.c.b16 %v697, %v694
    %v836 = vpack.c.b16 %v701, %v698
    %v837 = vpack.c.b16 %v702, %v699
    %v838 = vpack.c.b16 %v703, %v700
    %v839 = vpack.c.b16 %v707, %v704
    %v840 = vpack.c.b16 %v708, %v705
    %v841 = vpack.c.b16 %v709, %v706
    %v842 = vpack.c.b16 %v713, %v710
    %v843 = vpack.c.b16 %v714, %v711
    %v844 = vpack.c.b16 %v715, %v712
    %v845 = vpack.c.b16 %v719, %v716
    %v846 = vpack.c.b16 %v720, %v717
    %v847 = vpack.c.b16 %v721, %v718
    %v848 = vpack.c.b16 %v725, %v722
    %v849 = vpack.c.b16 %v726, %v723
    %v850 = vpack.c.b16 %v727, %v724
    %v851 = vpack.c.b16 %v731, %v728
    %v852 = vpack.c.b16 %v732, %v729
    %v853 = vpack.c.b16 %v733, %v730
    %v854 = vpack.c.b16 %v737, %v734
    %v855 = vpack.c.b16 %v738, %v735
    %v856 = vpack.c.b16 %v739, %v736
    %v857 = vpack.c.b16 %v743, %v740
    %v858 = vpack.c.b16 %v744, %v741
    %v859 = vpack.c.b16 %v745, %v742
    %v860 = vpack.c.b16 %v749, %v746
    %v861 = vpack.c.b16 %v750, %v747
    %v862 = vpack.c.b16 %v751, %v748
    %v863 = vpack.c.b16 %v755, %v752
    %v864 = vpack.c.b16 %v756, %v753
    %v865 = vpack.c.b16 %v757, %v754
    %v866 = vpack.c.b16 %v761, %v758
    %v867 = vpack.c.b16 %v762, %v759
    %v868 = vpack.c.b16 %v763, %v760
    %v869 = vpack.c.b16 %v767, %v764
    %v870 = vpack.c.b16 %v768, %v765
    %v871 = vpack.c.b16 %v769, %v766
    %v872 = vpack.c.b16 %v773, %v770
    %v873 = vpack.c.b16 %v774, %v771
    %v874 = vpack.c.b16 %v775, %v772
    %v875 = vpack.c.b16 %v779, %v776
    %v876 = vpack.c.b16 %v780, %v777
    %v877 = vpack.c.b16 %v781, %v778
    %v878 = vpack.c.b16 %v785, %v782
    %v879 = vpack.c.b16 %v786, %v783
    %v880 = vpack.c.b16 %v787, %v784
    %v881 = vpack.c.b16 %v791, %v788
    %v882 = vpack.c.b16 %v792, %v789
    %v883 = vpack.c.b16 %v793, %v790
    %v884 = vpack.c.b16 %v797, %v794
    %v885 = vpack.c.b16 %v798, %v795
    %v886 = vpack.c.b16 %v799, %v796
    %v887 = vpack.c.b16 %v803, %v800
    %v888 = vpack.c.b16 %v804, %v801
    %v889 = vpack.c.b16 %v805, %v802
    %v890 = vpack.c.b16 %v809, %v806
    %v891 = vpack.c.b16 %v810, %v807
    %v892 = vpack.c.b16 %v811, %v808
    %v893 = vpack.c.b16 %v815, %v812
    %v894 = vpack.c.b16 %v816, %v813
    %v895 = vpack.c.b16 %v817, %v814
    %v896 = vpack.c.b16 %v821, %v818
    %v897 = vpack.c.b16 %v822, %v819
    %v898 = vpack.c.b16 %v823, %v820
    %v899 = vpack.c.b16 %v827, %v824
    %v900 = vpack.c.b16 %v828, %v825
    %v901 = vpack.c.b16 %v829, %v826
    %974 = vmatpush.bf16.msra.mxu0 %v851
    %975 = vmatpush.bf16.msra.mxu0 %v848
    %976 = vmatpush.bf16.msra.mxu0 %v845
    %977 = vmatpush.bf16.msra.mxu0 %v842
    %978 = vmatpush.bf16.msra.mxu0 %v839
    %979 = vmatpush.bf16.msra.mxu0 %v836
    %980 = vmatpush.bf16.msra.mxu0 %v833
    %981 = vmatpush.bf16.msra.mxu0 %v830
    %982 = vmatmul.bf16.gmra.mxu0 %v581
    %v983 = vpop.f32.mrf.mxu0
    %v984 = vadd.f32 %v587, %v983
    %v985 = vpop.f32.mrf.mxu0
    %v986 = vadd.f32 %v587, %v985
    %987 = vmatmul.bf16.gmra.mxu0 %v584
    %v988 = vpop.f32.mrf.mxu0
    %v989 = vadd.f32 %v587, %v988
    %v990 = vpop.f32.mrf.mxu0
    %991 = vdwg.mxu0
    %992 = vmatpush.bf16.msra.mxu0 %v875
    %993 = vmatpush.bf16.msra.mxu0 %v872
    %994 = vmatpush.bf16.msra.mxu0 %v869
    %995 = vmatpush.bf16.msra.mxu0 %v866
    %996 = vmatpush.bf16.msra.mxu0 %v863
    %997 = vmatpush.bf16.msra.mxu0 %v860
    %998 = vmatpush.bf16.msra.mxu0 %v857
    %999 = vmatpush.bf16.msra.mxu0 %v854
    %1000 = vmatmul.bf16.gmra.mxu0 %v582
    %v1001 = vpop.f32.mrf.mxu0
    %v1002 = vadd.f32 %v984, %v1001
    %v1003 = vpop.f32.mrf.mxu0
    %v1004 = vadd.f32 %v986, %v1003
    %1005 = vmatmul.bf16.gmra.mxu0 %v585
    %v1006 = vpop.f32.mrf.mxu0
    %v1007 = vadd.f32 %v989, %v1006
    %v1008 = vpop.f32.mrf.mxu0
    %1009 = vdwg.mxu0
    %1010 = vmatpush.bf16.msra.mxu0 %v899
    %1011 = vmatpush.bf16.msra.mxu0 %v896
    %1012 = vmatpush.bf16.msra.mxu0 %v893
    %1013 = vmatpush.bf16.msra.mxu0 %v890
    %1014 = vmatpush.bf16.msra.mxu0 %v887
    %1015 = vmatpush.bf16.msra.mxu0 %v884
    %1016 = vmatpush.bf16.msra.mxu0 %v881
    %1017 = vmatpush.bf16.msra.mxu0 %v878
    %1018 = vmatmul.bf16.gmra.mxu0 %v583
    %v1019 = vpop.f32.mrf.mxu0
    %v1020 = vadd.f32 %v1002, %v1019
    %v1021 = vpop.f32.mrf.mxu0
    %v1022 = vadd.f32 %v1004, %v1021
    %1023 = vmatmul.bf16.gmra.mxu0 %v586
    %v1024 = vpop.f32.mrf.mxu0
    %v1025 = vadd.f32 %v1007, %v1024
    %v1026 = vpop.f32.mrf.mxu0
    %1027 = vdwg.mxu0
    %1028 = vmatpush.bf16.msra.mxu0 %v852
    %1029 = vmatpush.bf16.msra.mxu0 %v849
    %1030 = vmatpush.bf16.msra.mxu0 %v846
    %1031 = vmatpush.bf16.msra.mxu0 %v843
    %1032 = vmatpush.bf16.msra.mxu0 %v840
    %1033 = vmatpush.bf16.msra.mxu0 %v837
    %1034 = vmatpush.bf16.msra.mxu0 %v834
    %1035 = vmatpush.bf16.msra.mxu0 %v831
    %1036 = vmatmul.bf16.gmra.mxu0 %v581
    %v1037 = vpop.f32.mrf.mxu0
    %v1038 = vadd.f32 %v588, %v1037
    %v1039 = vpop.f32.mrf.mxu0
    %v1040 = vadd.f32 %v588, %v1039
    %1041 = vmatmul.bf16.gmra.mxu0 %v584
    %v1042 = vpop.f32.mrf.mxu0
    %v1043 = vadd.f32 %v588, %v1042
    %v1044 = vpop.f32.mrf.mxu0
    %1045 = vdwg.mxu0
    %1046 = vmatpush.bf16.msra.mxu0 %v876
    %1047 = vmatpush.bf16.msra.mxu0 %v873
    %1048 = vmatpush.bf16.msra.mxu0 %v870
    %1049 = vmatpush.bf16.msra.mxu0 %v867
    %1050 = vmatpush.bf16.msra.mxu0 %v864
    %1051 = vmatpush.bf16.msra.mxu0 %v861
    %1052 = vmatpush.bf16.msra.mxu0 %v858
    %1053 = vmatpush.bf16.msra.mxu0 %v855
    %1054 = vmatmul.bf16.gmra.mxu0 %v582
    %v1055 = vpop.f32.mrf.mxu0
    %v1056 = vadd.f32 %v1038, %v1055
    %v1057 = vpop.f32.mrf.mxu0
    %v1058 = vadd.f32 %v1040, %v1057
    %1059 = vmatmul.bf16.gmra.mxu0 %v585
    %v1060 = vpop.f32.mrf.mxu0
    %v1061 = vadd.f32 %v1043, %v1060
    %v1062 = vpop.f32.mrf.mxu0
    %1063 = vdwg.mxu0
    %1064 = vmatpush.bf16.msra.mxu0 %v900
    %1065 = vmatpush.bf16.msra.mxu0 %v897
    %1066 = vmatpush.bf16.msra.mxu0 %v894
    %1067 = vmatpush.bf16.msra.mxu0 %v891
    %1068 = vmatpush.bf16.msra.mxu0 %v888
    %1069 = vmatpush.bf16.msra.mxu0 %v885
    %1070 = vmatpush.bf16.msra.mxu0 %v882
    %1071 = vmatpush.bf16.msra.mxu0 %v879
    %1072 = vmatmul.bf16.gmra.mxu0 %v583
    %v1073 = vpop.f32.mrf.mxu0
    %v1074 = vadd.f32 %v1056, %v1073
    %v1075 = vpop.f32.mrf.mxu0
    %v1076 = vadd.f32 %v1058, %v1075
    %1077 = vmatmul.bf16.gmra.mxu0 %v586
    %v1078 = vpop.f32.mrf.mxu0
    %v1079 = vadd.f32 %v1061, %v1078
    %v1080 = vpop.f32.mrf.mxu0
    %1081 = vdwg.mxu0
    %1082 = vmatpush.bf16.msra.mxu0 %v853
    %1083 = vmatpush.bf16.msra.mxu0 %v850
    %1084 = vmatpush.bf16.msra.mxu0 %v847
    %1085 = vmatpush.bf16.msra.mxu0 %v844
    %1086 = vmatpush.bf16.msra.mxu0 %v841
    %1087 = vmatpush.bf16.msra.mxu0 %v838
    %1088 = vmatpush.bf16.msra.mxu0 %v835
    %1089 = vmatpush.bf16.msra.mxu0 %v832
    %1090 = vmatmul.bf16.gmra.mxu0 %v581
    %v1091 = vpop.f32.mrf.mxu0
    %v1092 = vadd.f32 %v589, %v1091
    %v1093 = vpop.f32.mrf.mxu0
    %v1094 = vadd.f32 %v589, %v1093
    %1095 = vmatmul.bf16.gmra.mxu0 %v584
    %v1096 = vpop.f32.mrf.mxu0
    %v1097 = vadd.f32 %v589, %v1096
    %v1098 = vpop.f32.mrf.mxu0
    %1099 = vdwg.mxu0
    %1100 = vmatpush.bf16.msra.mxu0 %v877
    %1101 = vmatpush.bf16.msra.mxu0 %v874
    %1102 = vmatpush.bf16.msra.mxu0 %v871
    %1103 = vmatpush.bf16.msra.mxu0 %v868
    %1104 = vmatpush.bf16.msra.mxu0 %v865
    %1105 = vmatpush.bf16.msra.mxu0 %v862
    %1106 = vmatpush.bf16.msra.mxu0 %v859
    %1107 = vmatpush.bf16.msra.mxu0 %v856
    %1108 = vmatmul.bf16.gmra.mxu0 %v582
    %v1109 = vpop.f32.mrf.mxu0
    %v1110 = vadd.f32 %v1092, %v1109
    %v1111 = vpop.f32.mrf.mxu0
    %v1112 = vadd.f32 %v1094, %v1111
    %1113 = vmatmul.bf16.gmra.mxu0 %v585
    %v1114 = vpop.f32.mrf.mxu0
    %v1115 = vadd.f32 %v1097, %v1114
    %v1116 = vpop.f32.mrf.mxu0
    %1117 = vdwg.mxu0
    %1118 = vmatpush.bf16.msra.mxu0 %v901
    %1119 = vmatpush.bf16.msra.mxu0 %v898
    %1120 = vmatpush.bf16.msra.mxu0 %v895
    %1121 = vmatpush.bf16.msra.mxu0 %v892
    %1122 = vmatpush.bf16.msra.mxu0 %v889
    %1123 = vmatpush.bf16.msra.mxu0 %v886
    %1124 = vmatpush.bf16.msra.mxu0 %v883
    %1125 = vmatpush.bf16.msra.mxu0 %v880
    %1126 = vmatmul.bf16.gmra.mxu0 %v583
    %v1127 = vpop.f32.mrf.mxu0
    %v1128 = vadd.f32 %v1110, %v1127
    %v1129 = vpop.f32.mrf.mxu0
    %v1130 = vadd.f32 %v1112, %v1129
    %1131 = vmatmul.bf16.gmra.mxu0 %v586
    %v1132 = vpop.f32.mrf.mxu0
    %v1133 = vadd.f32 %v1115, %v1132
    %v1134 = vpop.f32.mrf.mxu0
    %1135 = vdwg.mxu0
    %v1136 = vmax.f32 %v1020, 0.0
    %v1137 = vmax.f32 %v1074, 0.0
    %v1138 = vmax.f32 %v1128, 0.0
    %v1139 = vmax.f32 %v1022, 0.0
    %v1140 = vmax.f32 %v1076, 0.0
    %v1141 = vmax.f32 %v1130, 0.0
    %v1142 = vmax.f32 %v1025, 0.0
    %v1143 = vmax.f32 %v1079, 0.0
    %v1144 = vmax.f32 %v1133, 0.0
    %v1145 = vpack.c.bf16 %v1139, %v1136
    %v1146 = vpack.c.bf16 %v1140, %v1137
    %v1147 = vpack.c.bf16 %v1141, %v1138
    %v1148 = vpack.c.bf16 %v1142, %v1142
    %v1149 = vpack.c.bf16 %v1143, %v1143
    %v1150 = vpack.c.bf16 %v1144, %v1144
    %v1151 = vperm.slane %v136, 3
    %v1152 = vperm.slane %v137, 3
    %v1153 = vperm.slane %v138, 3
    %v1250 = vunpack.c.l.b16 %v485
    %v1251 = vunpack.c.h.b16 %v485
    %v1252 = vunpack.c.l.b16 %v486
    %v1253 = vunpack.c.l.b16 %v487
    %v1254 = vunpack.c.h.b16 %v487
    %v1255 = vunpack.c.l.b16 %v488
    %v1256 = vunpack.c.l.b16 %v489
    %v1257 = vunpack.c.h.b16 %v489
    %v1258 = vunpack.c.l.b16 %v490
    %v1259 = vunpack.c.l.b16 %v491
    %v1260 = vunpack.c.h.b16 %v491
    %v1261 = vunpack.c.l.b16 %v492
    %v1262 = vunpack.c.l.b16 %v493
    %v1263 = vunpack.c.h.b16 %v493
    %v1264 = vunpack.c.l.b16 %v494
    %v1265 = vunpack.c.l.b16 %v495
    %v1266 = vunpack.c.h.b16 %v495
    %v1267 = vunpack.c.l.b16 %v496
    %v1268 = vunpack.c.l.b16 %v497
    %v1269 = vunpack.c.h.b16 %v497
    %v1270 = vunpack.c.l.b16 %v498
    %v1271 = vunpack.c.l.b16 %v499
    %v1272 = vunpack.c.h.b16 %v499
    %v1273 = vunpack.c.l.b16 %v500
    %v1274 = vunpack.c.l.b16 %v501
    %v1275 = vunpack.c.h.b16 %v501
    %v1276 = vunpack.c.l.b16 %v502
    %v1277 = vunpack.c.l.b16 %v503
    %v1278 = vunpack.c.h.b16 %v503
    %v1279 = vunpack.c.l.b16 %v504
    %v1280 = vunpack.c.l.b16 %v505
    %v1281 = vunpack.c.h.b16 %v505
    %v1282 = vunpack.c.l.b16 %v506
    %v1283 = vunpack.c.l.b16 %v507
    %v1284 = vunpack.c.h.b16 %v507
    %v1285 = vunpack.c.l.b16 %v508
    %v1286 = vunpack.c.l.b16 %v509
    %v1287 = vunpack.c.h.b16 %v509
    %v1288 = vunpack.c.l.b16 %v510
    %v1289 = vunpack.c.l.b16 %v511
    %v1290 = vunpack.c.h.b16 %v511
    %v1291 = vunpack.c.l.b16 %v512
    %v1292 = vunpack.c.l.b16 %v513
    %v1293 = vunpack.c.h.b16 %v513
    %v1294 = vunpack.c.l.b16 %v514
    %v1295 = vunpack.c.l.b16 %v515
    %v1296 = vunpack.c.h.b16 %v515
    %v1297 = vunpack.c.l.b16 %v516
    %v1298 = vunpack.c.l.b16 %v517
    %v1299 = vunpack.c.h.b16 %v517
    %v1300 = vunpack.c.l.b16 %v518
    %v1301 = vunpack.c.l.b16 %v519
    %v1302 = vunpack.c.h.b16 %v519
    %v1303 = vunpack.c.l.b16 %v520
    %v1304 = vunpack.c.l.b16 %v521
    %v1305 = vunpack.c.h.b16 %v521
    %v1306 = vunpack.c.l.b16 %v522
    %v1307 = vunpack.c.l.b16 %v523
    %v1308 = vunpack.c.h.b16 %v523
    %v1309 = vunpack.c.l.b16 %v524
    %v1310 = vunpack.c.l.b16 %v525
    %v1311 = vunpack.c.h.b16 %v525
    %v1312 = vunpack.c.l.b16 %v526
    %v1313 = vunpack.c.l.b16 %v527
    %v1314 = vunpack.c.h.b16 %v527
    %v1315 = vunpack.c.l.b16 %v528
    %v1316 = vunpack.c.l.b16 %v529
    %v1317 = vunpack.c.h.b16 %v529
    %v1318 = vunpack.c.l.b16 %v530
    %v1319 = vunpack.c.l.b16 %v531
    %v1320 = vunpack.c.h.b16 %v531
    %v1321 = vunpack.c.l.b16 %v532
    %v1322 = vunpack.c.l.b16 %v533
    %v1323 = vunpack.c.h.b16 %v533
    %v1324 = vunpack.c.l.b16 %v534
    %v1325 = vunpack.c.l.b16 %v535
    %v1326 = vunpack.c.h.b16 %v535
    %v1327 = vunpack.c.l.b16 %v536
    %v1328 = vunpack.c.l.b16 %v537
    %v1329 = vunpack.c.h.b16 %v537
    %v1330 = vunpack.c.l.b16 %v538
    %v1331 = vunpack.c.l.b16 %v539
    %v1332 = vunpack.c.h.b16 %v539
    %v1333 = vunpack.c.l.b16 %v540
    %v1334 = vunpack.c.l.b16 %v541
    %v1335 = vunpack.c.h.b16 %v541
    %v1336 = vunpack.c.l.b16 %v542
    %v1337 = vunpack.c.l.b16 %v543
    %v1338 = vunpack.c.h.b16 %v543
    %v1339 = vunpack.c.l.b16 %v544
    %v1340 = vunpack.c.l.b16 %v545
    %v1341 = vunpack.c.h.b16 %v545
    %v1342 = vunpack.c.l.b16 %v546
    %v1343 = vunpack.c.l.b16 %v547
    %v1344 = vunpack.c.h.b16 %v547
    %v1345 = vunpack.c.l.b16 %v548
    %v1346 = vunpack.c.l.b16 %v549
    %v1347 = vunpack.c.h.b16 %v549
    %v1348 = vunpack.c.l.b16 %v550
    %v1349 = vunpack.c.l.b16 %v551
    %v1350 = vunpack.c.h.b16 %v551
    %v1351 = vunpack.c.l.b16 %v552
    %v1352 = vunpack.c.l.b16 %v553
    %v1353 = vunpack.c.h.b16 %v553
    %v1354 = vunpack.c.l.b16 %v554
    %v1355 = vunpack.c.l.b16 %v555
    %v1356 = vunpack.c.h.b16 %v555
    %v1357 = vunpack.c.l.b16 %v556
    %v1358 = vunpack.c.l.b16 %v557
    %v1359 = vunpack.c.h.b16 %v557
    %v1360 = vunpack.c.l.b16 %v558
    %v1361 = vunpack.c.l.b16 %v559
    %v1362 = vunpack.c.h.b16 %v559
    %v1363 = vunpack.c.l.b16 %v560
    %v1364 = vunpack.c.l.b16 %v561
    %v1365 = vunpack.c.h.b16 %v561
    %v1366 = vunpack.c.l.b16 %v562
    %v1367 = vunpack.c.l.b16 %v563
    %v1368 = vunpack.c.h.b16 %v563
    %v1369 = vunpack.c.l.b16 %v564
    %v1370 = vunpack.c.l.b16 %v565
    %v1371 = vunpack.c.h.b16 %v565
    %v1372 = vunpack.c.l.b16 %v566
    %v1373 = vunpack.c.l.b16 %v567
    %v1374 = vunpack.c.h.b16 %v567
    %v1375 = vunpack.c.l.b16 %v568
    %v1376 = vunpack.c.l.b16 %v569
    %v1377 = vunpack.c.h.b16 %v569
    %v1378 = vunpack.c.l.b16 %v570
    %v1379 = vunpack.c.l.b16 %v571
    %v1380 = vunpack.c.h.b16 %v571
    %v1381 = vunpack.c.l.b16 %v572
    %v1382 = vunpack.c.l.b16 %v573
    %v1383 = vunpack.c.h.b16 %v573
    %v1384 = vunpack.c.l.b16 %v574
    %v1385 = vunpack.c.l.b16 %v575
    %v1386 = vunpack.c.h.b16 %v575
    %v1387 = vunpack.c.l.b16 %v576
    %v1388 = vunpack.c.l.b16 %v577
    %v1389 = vunpack.c.h.b16 %v577
    %v1390 = vunpack.c.l.b16 %v578
    %v1391 = vunpack.c.l.b16 %v579
    %v1392 = vunpack.c.h.b16 %v579
    %v1393 = vunpack.c.l.b16 %v580
    %v1394 = vpack.c.b16 %v1253, %v1250
    %v1395 = vpack.c.b16 %v1254, %v1251
    %v1396 = vpack.c.b16 %v1255, %v1252
    %v1397 = vpack.c.b16 %v1259, %v1256
    %v1398 = vpack.c.b16 %v1260, %v1257
    %v1399 = vpack.c.b16 %v1261, %v1258
    %v1400 = vpack.c.b16 %v1265, %v1262
    %v1401 = vpack.c.b16 %v1266, %v1263
    %v1402 = vpack.c.b16 %v1267, %v1264
    %v1403 = vpack.c.b16 %v1271, %v1268
    %v1404 = vpack.c.b16 %v1272, %v1269
    %v1405 = vpack.c.b16 %v1273, %v1270
    %v1406 = vpack.c.b16 %v1277, %v1274
    %v1407 = vpack.c.b16 %v1278, %v1275
    %v1408 = vpack.c.b16 %v1279, %v1276
    %v1409 = vpack.c.b16 %v1283, %v1280
    %v1410 = vpack.c.b16 %v1284, %v1281
    %v1411 = vpack.c.b16 %v1285, %v1282
    %v1412 = vpack.c.b16 %v1289, %v1286
    %v1413 = vpack.c.b16 %v1290, %v1287
    %v1414 = vpack.c.b16 %v1291, %v1288
    %v1415 = vpack.c.b16 %v1295, %v1292
    %v1416 = vpack.c.b16 %v1296, %v1293
    %v1417 = vpack.c.b16 %v1297, %v1294
    %v1418 = vpack.c.b16 %v1301, %v1298
    %v1419 = vpack.c.b16 %v1302, %v1299
    %v1420 = vpack.c.b16 %v1303, %v1300
    %v1421 = vpack.c.b16 %v1307, %v1304
    %v1422 = vpack.c.b16 %v1308, %v1305
    %v1423 = vpack.c.b16 %v1309, %v1306
    %v1424 = vpack.c.b16 %v1313, %v1310
    %v1425 = vpack.c.b16 %v1314, %v1311
    %v1426 = vpack.c.b16 %v1315, %v1312
    %v1427 = vpack.c.b16 %v1319, %v1316
    %v1428 = vpack.c.b16 %v1320, %v1317
    %v1429 = vpack.c.b16 %v1321, %v1318
    %v1430 = vpack.c.b16 %v1325, %v1322
    %v1431 = vpack.c.b16 %v1326, %v1323
    %v1432 = vpack.c.b16 %v1327, %v1324
    %v1433 = vpack.c.b16 %v1331, %v1328
    %v1434 = vpack.c.b16 %v1332, %v1329
    %v1435 = vpack.c.b16 %v1333, %v1330
    %v1436 = vpack.c.b16 %v1337, %v1334
    %v1437 = vpack.c.b16 %v1338, %v1335
    %v1438 = vpack.c.b16 %v1339, %v1336
    %v1439 = vpack.c.b16 %v1343, %v1340
    %v1440 = vpack.c.b16 %v1344, %v1341
    %v1441 = vpack.c.b16 %v1345, %v1342
    %v1442 = vpack.c.b16 %v1349, %v1346
    %v1443 = vpack.c.b16 %v1350, %v1347
    %v1444 = vpack.c.b16 %v1351, %v1348
    %v1445 = vpack.c.b16 %v1355, %v1352
    %v1446 = vpack.c.b16 %v1356, %v1353
    %v1447 = vpack.c.b16 %v1357, %v1354
    %v1448 = vpack.c.b16 %v1361, %v1358
    %v1449 = vpack.c.b16 %v1362, %v1359
    %v1450 = vpack.c.b16 %v1363, %v1360
    %v1451 = vpack.c.b16 %v1367, %v1364
    %v1452 = vpack.c.b16 %v1368, %v1365
    %v1453 = vpack.c.b16 %v1369, %v1366
    %v1454 = vpack.c.b16 %v1373, %v1370
    %v1455 = vpack.c.b16 %v1374, %v1371
    %v1456 = vpack.c.b16 %v1375, %v1372
    %v1457 = vpack.c.b16 %v1379, %v1376
    %v1458 = vpack.c.b16 %v1380, %v1377
    %v1459 = vpack.c.b16 %v1381, %v1378
    %v1460 = vpack.c.b16 %v1385, %v1382
    %v1461 = vpack.c.b16 %v1386, %v1383
    %v1462 = vpack.c.b16 %v1387, %v1384
    %v1463 = vpack.c.b16 %v1391, %v1388
    %v1464 = vpack.c.b16 %v1392, %v1389
    %v1465 = vpack.c.b16 %v1393, %v1390
    %1538 = vmatpush.bf16.msra.mxu0 %v1415
    %1539 = vmatpush.bf16.msra.mxu0 %v1412
    %1540 = vmatpush.bf16.msra.mxu0 %v1409
    %1541 = vmatpush.bf16.msra.mxu0 %v1406
    %1542 = vmatpush.bf16.msra.mxu0 %v1403
    %1543 = vmatpush.bf16.msra.mxu0 %v1400
    %1544 = vmatpush.bf16.msra.mxu0 %v1397
    %1545 = vmatpush.bf16.msra.mxu0 %v1394
    %1546 = vmatmul.bf16.gmra.mxu0 %v1145
    %v1547 = vpop.f32.mrf.mxu0
    %v1548 = vadd.f32 %v1151, %v1547
    %v1549 = vpop.f32.mrf.mxu0
    %v1550 = vadd.f32 %v1151, %v1549
    %1551 = vmatmul.bf16.gmra.mxu0 %v1148
    %v1552 = vpop.f32.mrf.mxu0
    %v1553 = vadd.f32 %v1151, %v1552
    %v1554 = vpop.f32.mrf.mxu0
    %1555 = vdwg.mxu0
    %1556 = vmatpush.bf16.msra.mxu0 %v1439
    %1557 = vmatpush.bf16.msra.mxu0 %v1436
    %1558 = vmatpush.bf16.msra.mxu0 %v1433
    %1559 = vmatpush.bf16.msra.mxu0 %v1430
    %1560 = vmatpush.bf16.msra.mxu0 %v1427
    %1561 = vmatpush.bf16.msra.mxu0 %v1424
    %1562 = vmatpush.bf16.msra.mxu0 %v1421
    %1563 = vmatpush.bf16.msra.mxu0 %v1418
    %1564 = vmatmul.bf16.gmra.mxu0 %v1146
    %v1565 = vpop.f32.mrf.mxu0
    %v1566 = vadd.f32 %v1548, %v1565
    %v1567 = vpop.f32.mrf.mxu0
    %v1568 = vadd.f32 %v1550, %v1567
    %1569 = vmatmul.bf16.gmra.mxu0 %v1149
    %v1570 = vpop.f32.mrf.mxu0
    %v1571 = vadd.f32 %v1553, %v1570
    %v1572 = vpop.f32.mrf.mxu0
    %1573 = vdwg.mxu0
    %1574 = vmatpush.bf16.msra.mxu0 %v1463
    %1575 = vmatpush.bf16.msra.mxu0 %v1460
    %1576 = vmatpush.bf16.msra.mxu0 %v1457
    %1577 = vmatpush.bf16.msra.mxu0 %v1454
    %1578 = vmatpush.bf16.msra.mxu0 %v1451
    %1579 = vmatpush.bf16.msra.mxu0 %v1448
    %1580 = vmatpush.bf16.msra.mxu0 %v1445
    %1581 = vmatpush.bf16.msra.mxu0 %v1442
    %1582 = vmatmul.bf16.gmra.mxu0 %v1147
    %v1583 = vpop.f32.mrf.mxu0
    %v1584 = vadd.f32 %v1566, %v1583
    %v1585 = vpop.f32.mrf.mxu0
    %v1586 = vadd.f32 %v1568, %v1585
    %1587 = vmatmul.bf16.gmra.mxu0 %v1150
    %v1588 = vpop.f32.mrf.mxu0
    %v1589 = vadd.f32 %v1571, %v1588
    %v1590 = vpop.f32.mrf.mxu0
    %1591 = vdwg.mxu0
    %1592 = vmatpush.bf16.msra.mxu0 %v1416
    %1593 = vmatpush.bf16.msra.mxu0 %v1413
    %1594 = vmatpush.bf16.msra.mxu0 %v1410
    %1595 = vmatpush.bf16.msra.mxu0 %v1407
    %1596 = vmatpush.bf16.msra.mxu0 %v1404
    %1597 = vmatpush.bf16.msra.mxu0 %v1401
    %1598 = vmatpush.bf16.msra.mxu0 %v1398
    %1599 = vmatpush.bf16.msra.mxu0 %v1395
    %1600 = vmatmul.bf16.gmra.mxu0 %v1145
    %v1601 = vpop.f32.mrf.mxu0
    %v1602 = vadd.f32 %v1152, %v1601
    %v1603 = vpop.f32.mrf.mxu0
    %v1604 = vadd.f32 %v1152, %v1603
    %1605 = vmatmul.bf16.gmra.mxu0 %v1148
    %v1606 = vpop.f32.mrf.mxu0
    %v1607 = vadd.f32 %v1152, %v1606
    %v1608 = vpop.f32.mrf.mxu0
    %1609 = vdwg.mxu0
    %1610 = vmatpush.bf16.msra.mxu0 %v1440
    %1611 = vmatpush.bf16.msra.mxu0 %v1437
    %1612 = vmatpush.bf16.msra.mxu0 %v1434
    %1613 = vmatpush.bf16.msra.mxu0 %v1431
    %1614 = vmatpush.bf16.msra.mxu0 %v1428
    %1615 = vmatpush.bf16.msra.mxu0 %v1425
    %1616 = vmatpush.bf16.msra.mxu0 %v1422
    %1617 = vmatpush.bf16.msra.mxu0 %v1419
    %1618 = vmatmul.bf16.gmra.mxu0 %v1146
    %v1619 = vpop.f32.mrf.mxu0
    %v1620 = vadd.f32 %v1602, %v1619
    %v1621 = vpop.f32.mrf.mxu0
    %v1622 = vadd.f32 %v1604, %v1621
    %1623 = vmatmul.bf16.gmra.mxu0 %v1149
    %v1624 = vpop.f32.mrf.mxu0
    %v1625 = vadd.f32 %v1607, %v1624
    %v1626 = vpop.f32.mrf.mxu0
    %1627 = vdwg.mxu0
    %1628 = vmatpush.bf16.msra.mxu0 %v1464
    %1629 = vmatpush.bf16.msra.mxu0 %v1461
    %1630 = vmatpush.bf16.msra.mxu0 %v1458
    %1631 = vmatpush.bf16.msra.mxu0 %v1455
    %1632 = vmatpush.bf16.msra.mxu0 %v1452
    %1633 = vmatpush.bf16.msra.mxu0 %v1449
    %1634 = vmatpush.bf16.msra.mxu0 %v1446
    %1635 = vmatpush.bf16.msra.mxu0 %v1443
    %1636 = vmatmul.bf16.gmra.mxu0 %v1147
    %v1637 = vpop.f32.mrf.mxu0
    %v1638 = vadd.f32 %v1620, %v1637
    %v1639 = vpop.f32.mrf.mxu0
    %v1640 = vadd.f32 %v1622, %v1639
    %1641 = vmatmul.bf16.gmra.mxu0 %v1150
    %v1642 = vpop.f32.mrf.mxu0
    %v1643 = vadd.f32 %v1625, %v1642
    %v1644 = vpop.f32.mrf.mxu0
    %1645 = vdwg.mxu0
    %1646 = vmatpush.bf16.msra.mxu0 %v1417
    %1647 = vmatpush.bf16.msra.mxu0 %v1414
    %1648 = vmatpush.bf16.msra.mxu0 %v1411
    %1649 = vmatpush.bf16.msra.mxu0 %v1408
    %1650 = vmatpush.bf16.msra.mxu0 %v1405
    %1651 = vmatpush.bf16.msra.mxu0 %v1402
    %1652 = vmatpush.bf16.msra.mxu0 %v1399
    %1653 = vmatpush.bf16.msra.mxu0 %v1396
    %1654 = vmatmul.bf16.gmra.mxu0 %v1145
    %v1655 = vpop.f32.mrf.mxu0
    %v1656 = vadd.f32 %v1153, %v1655
    %v1657 = vpop.f32.mrf.mxu0
    %v1658 = vadd.f32 %v1153, %v1657
    %1659 = vmatmul.bf16.gmra.mxu0 %v1148
    %v1660 = vpop.f32.mrf.mxu0
    %v1661 = vadd.f32 %v1153, %v1660
    %v1662 = vpop.f32.mrf.mxu0
    %1663 = vdwg.mxu0
    %1664 = vmatpush.bf16.msra.mxu0 %v1441
    %1665 = vmatpush.bf16.msra.mxu0 %v1438
    %1666 = vmatpush.bf16.msra.mxu0 %v1435
    %1667 = vmatpush.bf16.msra.mxu0 %v1432
    %1668 = vmatpush.bf16.msra.mxu0 %v1429
    %1669 = vmatpush.bf16.msra.mxu0 %v1426
    %1670 = vmatpush.bf16.msra.mxu0 %v1423
    %1671 = vmatpush.bf16.msra.mxu0 %v1420
    %1672 = vmatmul.bf16.gmra.mxu0 %v1146
    %v1673 = vpop.f32.mrf.mxu0
    %v1674 = vadd.f32 %v1656, %v1673
    %v1675 = vpop.f32.mrf.mxu0
    %v1676 = vadd.f32 %v1658, %v1675
    %1677 = vmatmul.bf16.gmra.mxu0 %v1149
    %v1678 = vpop.f32.mrf.mxu0
    %v1679 = vadd.f32 %v1661, %v1678
    %v1680 = vpop.f32.mrf.mxu0
    %1681 = vdwg.mxu0
    %1682 = vmatpush.bf16.msra.mxu0 %v1465
    %1683 = vmatpush.bf16.msra.mxu0 %v1462
    %1684 = vmatpush.bf16.msra.mxu0 %v1459
    %1685 = vmatpush.bf16.msra.mxu0 %v1456
    %1686 = vmatpush.bf16.msra.mxu0 %v1453
    %1687 = vmatpush.bf16.msra.mxu0 %v1450
    %1688 = vmatpush.bf16.msra.mxu0 %v1447
    %1689 = vmatpush.bf16.msra.mxu0 %v1444
    %1690 = vmatmul.bf16.gmra.mxu0 %v1147
    %v1691 = vpop.f32.mrf.mxu0
    %v1692 = vadd.f32 %v1674, %v1691
    %v1693 = vpop.f32.mrf.mxu0
    %v1694 = vadd.f32 %v1676, %v1693
    %1695 = vmatmul.bf16.gmra.mxu0 %v1150
    %v1696 = vpop.f32.mrf.mxu0
    %v1697 = vadd.f32 %v1679, %v1696
    %v1698 = vpop.f32.mrf.mxu0
    %1699 = vdwg.mxu0
    %v1700 = vadd.f32 %v263, %v1584
    %v1701 = vadd.f32 %v264, %v1638
    %v1702 = vadd.f32 %v265, %v1692
    %v1703 = vadd.f32 %v266, %v1586
    %v1704 = vadd.f32 %v267, %v1640
    %v1705 = vadd.f32 %v268, %v1694
    %v1706 = vadd.f32 %v269, %v1589
    %v1707 = vadd.f32 %v270, %v1643
    %v1708 = vadd.f32 %v271, %v1697
    %v1709 = vadd.f32 %v1700, %v1701
    %v1710 = vadd.f32 %v1709, %v1702
    %1711 = vadd.xlane.f32.xlu0 %v1710
    %v1712 = vpop.xlane.xlu0 %1711
    %v1713 = vadd.f32 %v1703, %v1704
    %v1714 = vadd.f32 %v1713, %v1705
    %1715 = vadd.xlane.f32.xlu0 %v1714
    %v1716 = vpop.xlane.xlu0 %1715
    %v1717 = vadd.f32 %v1706, %v1707
    %v1718 = vadd.f32 %v1717, %v1708
    %1719 = vadd.xlane.f32.xlu0 %v1718
    %v1720 = vpop.xlane.xlu0 %1719
    %v1721 = vmul.f32 %v1712, %v169
    %v1722 = vmul.f32 %v1716, %v169
    %v1723 = vmul.f32 %v1720, %v169
    %v1724 = vsub.f32 %v1700, %v1721
    %v1725 = vsub.f32 %v1701, %v1721
    %v1726 = vsub.f32 %v1702, %v1721
    %v1727 = vsub.f32 %v1703, %v1722
    %v1728 = vsub.f32 %v1704, %v1722
    %v1729 = vsub.f32 %v1705, %v1722
    %v1730 = vsub.f32 %v1706, %v1723
    %v1731 = vsub.f32 %v1707, %v1723
    %v1732 = vsub.f32 %v1708, %v1723
    %v1733 = vmul.f32 %v1724, %v1724
    %v1734 = vmul.f32 %v1725, %v1725
    %v1735 = vmul.f32 %v1726, %v1726
    %v1736 = vmul.f32 %v1727, %v1727
    %v1737 = vmul.f32 %v1728, %v1728
    %v1738 = vmul.f32 %v1729, %v1729
    %v1739 = vmul.f32 %v1730, %v1730
    %v1740 = vmul.f32 %v1731, %v1731
    %v1741 = vmul.f32 %v1732, %v1732
    %v1742 = vadd.f32 %v1733, %v1734
    %v1743 = vadd.f32 %v1742, %v1735
    %1744 = vadd.xlane.f32.xlu0 %v1743
    %v1745 = vpop.xlane.xlu0 %1744
    %v1746 = vadd.f32 %v1736, %v1737
    %v1747 = vadd.f32 %v1746, %v1738
    %1748 = vadd.xlane.f32.xlu0 %v1747
    %v1749 = vpop.xlane.xlu0 %1748
    %v1750 = vadd.f32 %v1739, %v1740
    %v1751 = vadd.f32 %v1750, %v1741
    %1752 = vadd.xlane.f32.xlu0 %v1751
    %v1753 = vpop.xlane.xlu0 %1752
    %v1754 = vmul.f32 %v1745, %v169
    %v1755 = vmul.f32 %v1749, %v169
    %v1756 = vmul.f32 %v1753, %v169
    %v1757 = vadd.f32 %v1754, 1e-05
    %v1758 = vadd.f32 %v1755, 1e-05
    %v1759 = vadd.f32 %v1756, 1e-05
    %v1760 = vrsqrt.pop %v1757
    %v1761 = vmul.f32 %v1760, %v1757
    %v1762 = vmul.f32 %v1761, %v1760
    %v1763 = vmul.f32 0.5, %v1762
    %v1764 = vsub.f32 1.5, %v1763
    %v1765 = vmul.f32 %v1760, %v1764
    %vm1766 = vweird.f32 %v1757
    %vm1767 = vweird.f32 %v1760
    %vm1768 = vmor %vm1766, %vm1767
    %v1769 = vsel %vm1768, %v1760, %v1765
    %v1770 = vrsqrt.pop %v1758
    %v1771 = vmul.f32 %v1770, %v1758
    %v1772 = vmul.f32 %v1771, %v1770
    %v1773 = vmul.f32 0.5, %v1772
    %v1774 = vsub.f32 1.5, %v1773
    %v1775 = vmul.f32 %v1770, %v1774
    %vm1776 = vweird.f32 %v1758
    %vm1777 = vweird.f32 %v1770
    %vm1778 = vmor %vm1776, %vm1777
    %v1779 = vsel %vm1778, %v1770, %v1775
    %v1780 = vrsqrt.pop %v1759
    %v1781 = vmul.f32 %v1780, %v1759
    %v1782 = vmul.f32 %v1781, %v1780
    %v1783 = vmul.f32 0.5, %v1782
    %v1784 = vsub.f32 1.5, %v1783
    %v1785 = vmul.f32 %v1780, %v1784
    %vm1786 = vweird.f32 %v1759
    %vm1787 = vweird.f32 %v1780
    %vm1788 = vmor %vm1786, %vm1787
    %v1789 = vsel %vm1788, %v1780, %v1785
    %v1790 = vmul.f32 %v1724, %v1769
    %v1791 = vmul.f32 %v1725, %v1769
    %v1792 = vmul.f32 %v1726, %v1769
    %v1793 = vmul.f32 %v1727, %v1779
    %v1794 = vmul.f32 %v1728, %v1779
    %v1795 = vmul.f32 %v1729, %v1779
    %v1796 = vmul.f32 %v1730, %v1789
    %v1797 = vmul.f32 %v1731, %v1789
    %v1798 = vmul.f32 %v1732, %v1789
    %v1799 = vperm.slane %v136, 4
    %v1800 = vperm.slane %v137, 4
    %v1801 = vperm.slane %v138, 4
    %v1802 = vmul.f32 %v1790, %v1799
    %v1803 = vmul.f32 %v1791, %v1800
    %v1804 = vmul.f32 %v1792, %v1801
    %v1805 = vmul.f32 %v1793, %v1799
    %v1806 = vmul.f32 %v1794, %v1800
    %v1807 = vmul.f32 %v1795, %v1801
    %v1808 = vmul.f32 %v1796, %v1799
    %v1809 = vmul.f32 %v1797, %v1800
    %v1810 = vmul.f32 %v1798, %v1801
    %v1811 = vperm.slane %v136, 5
    %v1812 = vperm.slane %v137, 5
    %v1813 = vperm.slane %v138, 5
    %v1814 = vadd.f32 %v1802, %v1811
    %v1815 = vadd.f32 %v1803, %v1812
    %v1816 = vadd.f32 %v1804, %v1813
    %v1817 = vadd.f32 %v1805, %v1811
    %v1818 = vadd.f32 %v1806, %v1812
    %v1819 = vadd.f32 %v1807, %v1813
    %v1820 = vadd.f32 %v1808, %v1811
    %v1821 = vadd.f32 %v1809, %v1812
    %v1822 = vadd.f32 %v1810, %v1813
    %v1823 = vld [vmem:[#allocation11] sm:$0xff]
    %v1824 = vld [vmem:[#allocation11 + $0x8] sm:$0xf]
    %v1825 = vld [vmem:[#allocation11 + $0xc] sm:$0xff]
    %v1826 = vld [vmem:[#allocation11 + $0x14] sm:$0xf]
    %v1827 = vld [vmem:[#allocation11 + $0x18] sm:$0xff]
    %v1828 = vld [vmem:[#allocation11 + $0x20] sm:$0xf]
    %v1829 = vld [vmem:[#allocation11 + $0x24] sm:$0xff]
    %v1830 = vld [vmem:[#allocation11 + $0x2c] sm:$0xf]
    %v1831 = vld [vmem:[#allocation11 + $0x30] sm:$0xff]
    %v1832 = vld [vmem:[#allocation11 + $0x38] sm:$0xf]
    %v1833 = vld [vmem:[#allocation11 + $0x3c] sm:$0xff]
    %v1834 = vld [vmem:[#allocation11 + $0x44] sm:$0xf]
    %v1835 = vld [vmem:[#allocation11 + $0x48] sm:$0xff]
    %v1836 = vld [vmem:[#allocation11 + $0x50] sm:$0xf]
    %v1837 = vld [vmem:[#allocation11 + $0x54] sm:$0xff]
    %v1838 = vld [vmem:[#allocation11 + $0x5c] sm:$0xf]
    %v1839 = vld [vmem:[#allocation11 + $0x60] sm:$0xff]
    %v1840 = vld [vmem:[#allocation11 + $0x68] sm:$0xf]
    %v1841 = vld [vmem:[#allocation11 + $0x6c] sm:$0xff]
    %v1842 = vld [vmem:[#allocation11 + $0x74] sm:$0xf]
    %v1843 = vld [vmem:[#allocation11 + $0x78] sm:$0xff]
    %v1844 = vld [vmem:[#allocation11 + $0x80] sm:$0xf]
    %v1845 = vld [vmem:[#allocation11 + $0x84] sm:$0xff]
    %v1846 = vld [vmem:[#allocation11 + $0x8c] sm:$0xf]
    %v1847 = vld [vmem:[#allocation11 + $0x90] sm:$0xff]
    %v1848 = vld [vmem:[#allocation11 + $0x98] sm:$0xf]
    %v1849 = vld [vmem:[#allocation11 + $0x9c] sm:$0xff]
    %v1850 = vld [vmem:[#allocation11 + $0xa4] sm:$0xf]
    %v1851 = vld [vmem:[#allocation11 + $0xa8] sm:$0xff]
    %v1852 = vld [vmem:[#allocation11 + $0xb0] sm:$0xf]
    %v1853 = vld [vmem:[#allocation11 + $0xb4] sm:$0xff]
    %v1854 = vld [vmem:[#allocation11 + $0xbc] sm:$0xf]
    %v1855 = vld [vmem:[#allocation11 + $0xc0] sm:$0xff]
    %v1856 = vld [vmem:[#allocation11 + $0xc8] sm:$0xf]
    %v1857 = vld [vmem:[#allocation11 + $0xcc] sm:$0xff]
    %v1858 = vld [vmem:[#allocation11 + $0xd4] sm:$0xf]
    %v1859 = vld [vmem:[#allocation11 + $0xd8] sm:$0xff]
    %v1860 = vld [vmem:[#allocation11 + $0xe0] sm:$0xf]
    %v1861 = vld [vmem:[#allocation11 + $0xe4] sm:$0xff]
    %v1862 = vld [vmem:[#allocation11 + $0xec] sm:$0xf]
    %v1863 = vld [vmem:[#allocation11 + $0xf0] sm:$0xff]
    %v1864 = vld [vmem:[#allocation11 + $0xf8] sm:$0xf]
    %v1865 = vld [vmem:[#allocation11 + $0xfc] sm:$0xff]
    %v1866 = vld [vmem:[#allocation11 + $0x104] sm:$0xf]
    %v1867 = vld [vmem:[#allocation11 + $0x108] sm:$0xff]
    %v1868 = vld [vmem:[#allocation11 + $0x110] sm:$0xf]
    %v1869 = vld [vmem:[#allocation11 + $0x114] sm:$0xff]
    %v1870 = vld [vmem:[#allocation11 + $0x11c] sm:$0xf]
    %v1871 = vld [vmem:[#allocation11 + $0x120] sm:$0xff]
    %v1872 = vld [vmem:[#allocation11 + $0x128] sm:$0xf]
    %v1873 = vld [vmem:[#allocation11 + $0x12c] sm:$0xff]
    %v1874 = vld [vmem:[#allocation11 + $0x134] sm:$0xf]
    %v1875 = vld [vmem:[#allocation11 + $0x138] sm:$0xff]
    %v1876 = vld [vmem:[#allocation11 + $0x140] sm:$0xf]
    %v1877 = vld [vmem:[#allocation11 + $0x144] sm:$0xff]
    %v1878 = vld [vmem:[#allocation11 + $0x14c] sm:$0xf]
    %v1879 = vld [vmem:[#allocation11 + $0x150] sm:$0xff]
    %v1880 = vld [vmem:[#allocation11 + $0x158] sm:$0xf]
    %v1881 = vld [vmem:[#allocation11 + $0x15c] sm:$0xff]
    %v1882 = vld [vmem:[#allocation11 + $0x164] sm:$0xf]
    %v1883 = vld [vmem:[#allocation11 + $0x168] sm:$0xff]
    %v1884 = vld [vmem:[#allocation11 + $0x170] sm:$0xf]
    %v1885 = vld [vmem:[#allocation11 + $0x174] sm:$0xff]
    %v1886 = vld [vmem:[#allocation11 + $0x17c] sm:$0xf]
    %v1887 = vld [vmem:[#allocation11 + $0x180] sm:$0xff]
    %v1888 = vld [vmem:[#allocation11 + $0x188] sm:$0xf]
    %v1889 = vld [vmem:[#allocation11 + $0x18c] sm:$0xff]
    %v1890 = vld [vmem:[#allocation11 + $0x194] sm:$0xf]
    %v1891 = vld [vmem:[#allocation11 + $0x198] sm:$0xff]
    %v1892 = vld [vmem:[#allocation11 + $0x1a0] sm:$0xf]
    %v1893 = vld [vmem:[#allocation11 + $0x1a4] sm:$0xff]
    %v1894 = vld [vmem:[#allocation11 + $0x1ac] sm:$0xf]
    %v1895 = vld [vmem:[#allocation11 + $0x1b0] sm:$0xff]
    %v1896 = vld [vmem:[#allocation11 + $0x1b8] sm:$0xf]
    %v1897 = vld [vmem:[#allocation11 + $0x1bc] sm:$0xff]
    %v1898 = vld [vmem:[#allocation11 + $0x1c4] sm:$0xf]
    %v1899 = vld [vmem:[#allocation11 + $0x1c8] sm:$0xff]
    %v1900 = vld [vmem:[#allocation11 + $0x1d0] sm:$0xf]
    %v1901 = vld [vmem:[#allocation11 + $0x1d4] sm:$0xff]
    %v1902 = vld [vmem:[#allocation11 + $0x1dc] sm:$0xf]
    %v1903 = vld [vmem:[#allocation11 + $0x1e0] sm:$0xff]
    %v1904 = vld [vmem:[#allocation11 + $0x1e8] sm:$0xf]
    %v1905 = vld [vmem:[#allocation11 + $0x1ec] sm:$0xff]
    %v1906 = vld [vmem:[#allocation11 + $0x1f4] sm:$0xf]
    %v1907 = vld [vmem:[#allocation11 + $0x1f8] sm:$0xff]
    %v1908 = vld [vmem:[#allocation11 + $0x200] sm:$0xf]
    %v1909 = vld [vmem:[#allocation11 + $0x204] sm:$0xff]
    %v1910 = vld [vmem:[#allocation11 + $0x20c] sm:$0xf]
    %v1911 = vld [vmem:[#allocation11 + $0x210] sm:$0xff]
    %v1912 = vld [vmem:[#allocation11 + $0x218] sm:$0xf]
    %v1913 = vld [vmem:[#allocation11 + $0x21c] sm:$0xff]
    %v1914 = vld [vmem:[#allocation11 + $0x224] sm:$0xf]
    %v1915 = vld [vmem:[#allocation11 + $0x228] sm:$0xff]
    %v1916 = vld [vmem:[#allocation11 + $0x230] sm:$0xf]
    %v1917 = vld [vmem:[#allocation11 + $0x234] sm:$0xff]
    %v1918 = vld [vmem:[#allocation11 + $0x23c] sm:$0xf]
    %v1919 = vld [vmem:[#allocation13] sm:$0xff]
    %v1920 = vld [vmem:[#allocation13 + $0x8] sm:$0xf]
    %v1921 = vld [vmem:[#allocation13 + $0xc] sm:$0xff]
    %v1922 = vld [vmem:[#allocation13 + $0x14] sm:$0xf]
    %v1923 = vld [vmem:[#allocation13 + $0x18] sm:$0xff]
    %v1924 = vld [vmem:[#allocation13 + $0x20] sm:$0xf]
    %v1925 = vld [vmem:[#allocation13 + $0x24] sm:$0xff]
    %v1926 = vld [vmem:[#allocation13 + $0x2c] sm:$0xf]
    %v1927 = vld [vmem:[#allocation13 + $0x30] sm:$0xff]
    %v1928 = vld [vmem:[#allocation13 + $0x38] sm:$0xf]
    %v1929 = vld [vmem:[#allocation13 + $0x3c] sm:$0xff]
    %v1930 = vld [vmem:[#allocation13 + $0x44] sm:$0xf]
    %v1931 = vld [vmem:[#allocation13 + $0x48] sm:$0xff]
    %v1932 = vld [vmem:[#allocation13 + $0x50] sm:$0xf]
    %v1933 = vld [vmem:[#allocation13 + $0x54] sm:$0xff]
    %v1934 = vld [vmem:[#allocation13 + $0x5c] sm:$0xf]
    %v1935 = vld [vmem:[#allocation13 + $0x60] sm:$0xff]
    %v1936 = vld [vmem:[#allocation13 + $0x68] sm:$0xf]
    %v1937 = vld [vmem:[#allocation13 + $0x6c] sm:$0xff]
    %v1938 = vld [vmem:[#allocation13 + $0x74] sm:$0xf]
    %v1939 = vld [vmem:[#allocation13 + $0x78] sm:$0xff]
    %v1940 = vld [vmem:[#allocation13 + $0x80] sm:$0xf]
    %v1941 = vld [vmem:[#allocation13 + $0x84] sm:$0xff]
    %v1942 = vld [vmem:[#allocation13 + $0x8c] sm:$0xf]
    %v1943 = vld [vmem:[#allocation13 + $0x90] sm:$0xff]
    %v1944 = vld [vmem:[#allocation13 + $0x98] sm:$0xf]
    %v1945 = vld [vmem:[#allocation13 + $0x9c] sm:$0xff]
    %v1946 = vld [vmem:[#allocation13 + $0xa4] sm:$0xf]
    %v1947 = vld [vmem:[#allocation13 + $0xa8] sm:$0xff]
    %v1948 = vld [vmem:[#allocation13 + $0xb0] sm:$0xf]
    %v1949 = vld [vmem:[#allocation13 + $0xb4] sm:$0xff]
    %v1950 = vld [vmem:[#allocation13 + $0xbc] sm:$0xf]
    %v1951 = vld [vmem:[#allocation13 + $0xc0] sm:$0xff]
    %v1952 = vld [vmem:[#allocation13 + $0xc8] sm:$0xf]
    %v1953 = vld [vmem:[#allocation13 + $0xcc] sm:$0xff]
    %v1954 = vld [vmem:[#allocation13 + $0xd4] sm:$0xf]
    %v1955 = vld [vmem:[#allocation13 + $0xd8] sm:$0xff]
    %v1956 = vld [vmem:[#allocation13 + $0xe0] sm:$0xf]
    %v1957 = vld [vmem:[#allocation13 + $0xe4] sm:$0xff]
    %v1958 = vld [vmem:[#allocation13 + $0xec] sm:$0xf]
    %v1959 = vld [vmem:[#allocation13 + $0xf0] sm:$0xff]
    %v1960 = vld [vmem:[#allocation13 + $0xf8] sm:$0xf]
    %v1961 = vld [vmem:[#allocation13 + $0xfc] sm:$0xff]
    %v1962 = vld [vmem:[#allocation13 + $0x104] sm:$0xf]
    %v1963 = vld [vmem:[#allocation13 + $0x108] sm:$0xff]
    %v1964 = vld [vmem:[#allocation13 + $0x110] sm:$0xf]
    %v1965 = vld [vmem:[#allocation13 + $0x114] sm:$0xff]
    %v1966 = vld [vmem:[#allocation13 + $0x11c] sm:$0xf]
    %v1967 = vld [vmem:[#allocation13 + $0x120] sm:$0xff]
    %v1968 = vld [vmem:[#allocation13 + $0x128] sm:$0xf]
    %v1969 = vld [vmem:[#allocation13 + $0x12c] sm:$0xff]
    %v1970 = vld [vmem:[#allocation13 + $0x134] sm:$0xf]
    %v1971 = vld [vmem:[#allocation13 + $0x138] sm:$0xff]
    %v1972 = vld [vmem:[#allocation13 + $0x140] sm:$0xf]
    %v1973 = vld [vmem:[#allocation13 + $0x144] sm:$0xff]
    %v1974 = vld [vmem:[#allocation13 + $0x14c] sm:$0xf]
    %v1975 = vld [vmem:[#allocation13 + $0x150] sm:$0xff]
    %v1976 = vld [vmem:[#allocation13 + $0x158] sm:$0xf]
    %v1977 = vld [vmem:[#allocation13 + $0x15c] sm:$0xff]
    %v1978 = vld [vmem:[#allocation13 + $0x164] sm:$0xf]
    %v1979 = vld [vmem:[#allocation13 + $0x168] sm:$0xff]
    %v1980 = vld [vmem:[#allocation13 + $0x170] sm:$0xf]
    %v1981 = vld [vmem:[#allocation13 + $0x174] sm:$0xff]
    %v1982 = vld [vmem:[#allocation13 + $0x17c] sm:$0xf]
    %v1983 = vld [vmem:[#allocation13 + $0x180] sm:$0xff]
    %v1984 = vld [vmem:[#allocation13 + $0x188] sm:$0xf]
    %v1985 = vld [vmem:[#allocation13 + $0x18c] sm:$0xff]
    %v1986 = vld [vmem:[#allocation13 + $0x194] sm:$0xf]
    %v1987 = vld [vmem:[#allocation13 + $0x198] sm:$0xff]
    %v1988 = vld [vmem:[#allocation13 + $0x1a0] sm:$0xf]
    %v1989 = vld [vmem:[#allocation13 + $0x1a4] sm:$0xff]
    %v1990 = vld [vmem:[#allocation13 + $0x1ac] sm:$0xf]
    %v1991 = vld [vmem:[#allocation13 + $0x1b0] sm:$0xff]
    %v1992 = vld [vmem:[#allocation13 + $0x1b8] sm:$0xf]
    %v1993 = vld [vmem:[#allocation13 + $0x1bc] sm:$0xff]
    %v1994 = vld [vmem:[#allocation13 + $0x1c4] sm:$0xf]
    %v1995 = vld [vmem:[#allocation13 + $0x1c8] sm:$0xff]
    %v1996 = vld [vmem:[#allocation13 + $0x1d0] sm:$0xf]
    %v1997 = vld [vmem:[#allocation13 + $0x1d4] sm:$0xff]
    %v1998 = vld [vmem:[#allocation13 + $0x1dc] sm:$0xf]
    %v1999 = vld [vmem:[#allocation13 + $0x1e0] sm:$0xff]
    %v2000 = vld [vmem:[#allocation13 + $0x1e8] sm:$0xf]
    %v2001 = vld [vmem:[#allocation13 + $0x1ec] sm:$0xff]
    %v2002 = vld [vmem:[#allocation13 + $0x1f4] sm:$0xf]
    %v2003 = vld [vmem:[#allocation13 + $0x1f8] sm:$0xff]
    %v2004 = vld [vmem:[#allocation13 + $0x200] sm:$0xf]
    %v2005 = vld [vmem:[#allocation13 + $0x204] sm:$0xff]
    %v2006 = vld [vmem:[#allocation13 + $0x20c] sm:$0xf]
    %v2007 = vld [vmem:[#allocation13 + $0x210] sm:$0xff]
    %v2008 = vld [vmem:[#allocation13 + $0x218] sm:$0xf]
    %v2009 = vld [vmem:[#allocation13 + $0x21c] sm:$0xff]
    %v2010 = vld [vmem:[#allocation13 + $0x224] sm:$0xf]
    %v2011 = vld [vmem:[#allocation13 + $0x228] sm:$0xff]
    %v2012 = vld [vmem:[#allocation13 + $0x230] sm:$0xf]
    %v2013 = vld [vmem:[#allocation13 + $0x234] sm:$0xff]
    %v2014 = vld [vmem:[#allocation13 + $0x23c] sm:$0xf]
    %v2015 = vpack.c.bf16 %v383, %v380
    %v2016 = vpack.c.bf16 %v384, %v381
    %v2017 = vpack.c.bf16 %v385, %v382
    %v2018 = vpack.c.bf16 %v386, %v386
    %v2019 = vpack.c.bf16 %v387, %v387
    %v2020 = vpack.c.bf16 %v388, %v388
    %v2021 = vperm.slane %v136, 6
    %v2022 = vperm.slane %v137, 6
    %v2023 = vperm.slane %v138, 6
    %v2120 = vunpack.c.l.b16 %v1823
    %v2121 = vunpack.c.h.b16 %v1823
    %v2122 = vunpack.c.l.b16 %v1824
    %v2123 = vunpack.c.l.b16 %v1825
    %v2124 = vunpack.c.h.b16 %v1825
    %v2125 = vunpack.c.l.b16 %v1826
    %v2126 = vunpack.c.l.b16 %v1827
    %v2127 = vunpack.c.h.b16 %v1827
    %v2128 = vunpack.c.l.b16 %v1828
    %v2129 = vunpack.c.l.b16 %v1829
    %v2130 = vunpack.c.h.b16 %v1829
    %v2131 = vunpack.c.l.b16 %v1830
    %v2132 = vunpack.c.l.b16 %v1831
    %v2133 = vunpack.c.h.b16 %v1831
    %v2134 = vunpack.c.l.b16 %v1832
    %v2135 = vunpack.c.l.b16 %v1833
    %v2136 = vunpack.c.h.b16 %v1833
    %v2137 = vunpack.c.l.b16 %v1834
    %v2138 = vunpack.c.l.b16 %v1835
    %v2139 = vunpack.c.h.b16 %v1835
    %v2140 = vunpack.c.l.b16 %v1836
    %v2141 = vunpack.c.l.b16 %v1837
    %v2142 = vunpack.c.h.b16 %v1837
    %v2143 = vunpack.c.l.b16 %v1838
    %v2144 = vunpack.c.l.b16 %v1839
    %v2145 = vunpack.c.h.b16 %v1839
    %v2146 = vunpack.c.l.b16 %v1840
    %v2147 = vunpack.c.l.b16 %v1841
    %v2148 = vunpack.c.h.b16 %v1841
    %v2149 = vunpack.c.l.b16 %v1842
    %v2150 = vunpack.c.l.b16 %v1843
    %v2151 = vunpack.c.h.b16 %v1843
    %v2152 = vunpack.c.l.b16 %v1844
    %v2153 = vunpack.c.l.b16 %v1845
    %v2154 = vunpack.c.h.b16 %v1845
    %v2155 = vunpack.c.l.b16 %v1846
    %v2156 = vunpack.c.l.b16 %v1847
    %v2157 = vunpack.c.h.b16 %v1847
    %v2158 = vunpack.c.l.b16 %v1848
    %v2159 = vunpack.c.l.b16 %v1849
    %v2160 = vunpack.c.h.b16 %v1849
    %v2161 = vunpack.c.l.b16 %v1850
    %v2162 = vunpack.c.l.b16 %v1851
    %v2163 = vunpack.c.h.b16 %v1851
    %v2164 = vunpack.c.l.b16 %v1852
    %v2165 = vunpack.c.l.b16 %v1853
    %v2166 = vunpack.c.h.b16 %v1853
    %v2167 = vunpack.c.l.b16 %v1854
    %v2168 = vunpack.c.l.b16 %v1855
    %v2169 = vunpack.c.h.b16 %v1855
    %v2170 = vunpack.c.l.b16 %v1856
    %v2171 = vunpack.c.l.b16 %v1857
    %v2172 = vunpack.c.h.b16 %v1857
    %v2173 = vunpack.c.l.b16 %v1858
    %v2174 = vunpack.c.l.b16 %v1859
    %v2175 = vunpack.c.h.b16 %v1859
    %v2176 = vunpack.c.l.b16 %v1860
    %v2177 = vunpack.c.l.b16 %v1861
    %v2178 = vunpack.c.h.b16 %v1861
    %v2179 = vunpack.c.l.b16 %v1862
    %v2180 = vunpack.c.l.b16 %v1863
    %v2181 = vunpack.c.h.b16 %v1863
    %v2182 = vunpack.c.l.b16 %v1864
    %v2183 = vunpack.c.l.b16 %v1865
    %v2184 = vunpack.c.h.b16 %v1865
    %v2185 = vunpack.c.l.b16 %v1866
    %v2186 = vunpack.c.l.b16 %v1867
    %v2187 = vunpack.c.h.b16 %v1867
    %v2188 = vunpack.c.l.b16 %v1868
    %v2189 = vunpack.c.l.b16 %v1869
    %v2190 = vunpack.c.h.b16 %v1869
    %v2191 = vunpack.c.l.b16 %v1870
    %v2192 = vunpack.c.l.b16 %v1871
    %v2193 = vunpack.c.h.b16 %v1871
    %v2194 = vunpack.c.l.b16 %v1872
    %v2195 = vunpack.c.l.b16 %v1873
    %v2196 = vunpack.c.h.b16 %v1873
    %v2197 = vunpack.c.l.b16 %v1874
    %v2198 = vunpack.c.l.b16 %v1875
    %v2199 = vunpack.c.h.b16 %v1875
    %v2200 = vunpack.c.l.b16 %v1876
    %v2201 = vunpack.c.l.b16 %v1877
    %v2202 = vunpack.c.h.b16 %v1877
    %v2203 = vunpack.c.l.b16 %v1878
    %v2204 = vunpack.c.l.b16 %v1879
    %v2205 = vunpack.c.h.b16 %v1879
    %v2206 = vunpack.c.l.b16 %v1880
    %v2207 = vunpack.c.l.b16 %v1881
    %v2208 = vunpack.c.h.b16 %v1881
    %v2209 = vunpack.c.l.b16 %v1882
    %v2210 = vunpack.c.l.b16 %v1883
    %v2211 = vunpack.c.h.b16 %v1883
    %v2212 = vunpack.c.l.b16 %v1884
    %v2213 = vunpack.c.l.b16 %v1885
    %v2214 = vunpack.c.h.b16 %v1885
    %v2215 = vunpack.c.l.b16 %v1886
    %v2216 = vunpack.c.l.b16 %v1887
    %v2217 = vunpack.c.h.b16 %v1887
    %v2218 = vunpack.c.l.b16 %v1888
    %v2219 = vunpack.c.l.b16 %v1889
    %v2220 = vunpack.c.h.b16 %v1889
    %v2221 = vunpack.c.l.b16 %v1890
    %v2222 = vunpack.c.l.b16 %v1891
    %v2223 = vunpack.c.h.b16 %v1891
    %v2224 = vunpack.c.l.b16 %v1892
    %v2225 = vunpack.c.l.b16 %v1893
    %v2226 = vunpack.c.h.b16 %v1893
    %v2227 = vunpack.c.l.b16 %v1894
    %v2228 = vunpack.c.l.b16 %v1895
    %v2229 = vunpack.c.h.b16 %v1895
    %v2230 = vunpack.c.l.b16 %v1896
    %v2231 = vunpack.c.l.b16 %v1897
    %v2232 = vunpack.c.h.b16 %v1897
    %v2233 = vunpack.c.l.b16 %v1898
    %v2234 = vunpack.c.l.b16 %v1899
    %v2235 = vunpack.c.h.b16 %v1899
    %v2236 = vunpack.c.l.b16 %v1900
    %v2237 = vunpack.c.l.b16 %v1901
    %v2238 = vunpack.c.h.b16 %v1901
    %v2239 = vunpack.c.l.b16 %v1902
    %v2240 = vunpack.c.l.b16 %v1903
    %v2241 = vunpack.c.h.b16 %v1903
    %v2242 = vunpack.c.l.b16 %v1904
    %v2243 = vunpack.c.l.b16 %v1905
    %v2244 = vunpack.c.h.b16 %v1905
    %v2245 = vunpack.c.l.b16 %v1906
    %v2246 = vunpack.c.l.b16 %v1907
    %v2247 = vunpack.c.h.b16 %v1907
    %v2248 = vunpack.c.l.b16 %v1908
    %v2249 = vunpack.c.l.b16 %v1909
    %v2250 = vunpack.c.h.b16 %v1909
    %v2251 = vunpack.c.l.b16 %v1910
    %v2252 = vunpack.c.l.b16 %v1911
    %v2253 = vunpack.c.h.b16 %v1911
    %v2254 = vunpack.c.l.b16 %v1912
    %v2255 = vunpack.c.l.b16 %v1913
    %v2256 = vunpack.c.h.b16 %v1913
    %v2257 = vunpack.c.l.b16 %v1914
    %v2258 = vunpack.c.l.b16 %v1915
    %v2259 = vunpack.c.h.b16 %v1915
    %v2260 = vunpack.c.l.b16 %v1916
    %v2261 = vunpack.c.l.b16 %v1917
    %v2262 = vunpack.c.h.b16 %v1917
    %v2263 = vunpack.c.l.b16 %v1918
    %v2264 = vpack.c.b16 %v2123, %v2120
    %v2265 = vpack.c.b16 %v2124, %v2121
    %v2266 = vpack.c.b16 %v2125, %v2122
    %v2267 = vpack.c.b16 %v2129, %v2126
    %v2268 = vpack.c.b16 %v2130, %v2127
    %v2269 = vpack.c.b16 %v2131, %v2128
    %v2270 = vpack.c.b16 %v2135, %v2132
    %v2271 = vpack.c.b16 %v2136, %v2133
    %v2272 = vpack.c.b16 %v2137, %v2134
    %v2273 = vpack.c.b16 %v2141, %v2138
    %v2274 = vpack.c.b16 %v2142, %v2139
    %v2275 = vpack.c.b16 %v2143, %v2140
    %v2276 = vpack.c.b16 %v2147, %v2144
    %v2277 = vpack.c.b16 %v2148, %v2145
    %v2278 = vpack.c.b16 %v2149, %v2146
    %v2279 = vpack.c.b16 %v2153, %v2150
    %v2280 = vpack.c.b16 %v2154, %v2151
    %v2281 = vpack.c.b16 %v2155, %v2152
    %v2282 = vpack.c.b16 %v2159, %v2156
    %v2283 = vpack.c.b16 %v2160, %v2157
    %v2284 = vpack.c.b16 %v2161, %v2158
    %v2285 = vpack.c.b16 %v2165, %v2162
    %v2286 = vpack.c.b16 %v2166, %v2163
    %v2287 = vpack.c.b16 %v2167, %v2164
    %v2288 = vpack.c.b16 %v2171, %v2168
    %v2289 = vpack.c.b16 %v2172, %v2169
    %v2290 = vpack.c.b16 %v2173, %v2170
    %v2291 = vpack.c.b16 %v2177, %v2174
    %v2292 = vpack.c.b16 %v2178, %v2175
    %v2293 = vpack.c.b16 %v2179, %v2176
    %v2294 = vpack.c.b16 %v2183, %v2180
    %v2295 = vpack.c.b16 %v2184, %v2181
    %v2296 = vpack.c.b16 %v2185, %v2182
    %v2297 = vpack.c.b16 %v2189, %v2186
    %v2298 = vpack.c.b16 %v2190, %v2187
    %v2299 = vpack.c.b16 %v2191, %v2188
    %v2300 = vpack.c.b16 %v2195, %v2192
    %v2301 = vpack.c.b16 %v2196, %v2193
    %v2302 = vpack.c.b16 %v2197, %v2194
    %v2303 = vpack.c.b16 %v2201, %v2198
    %v2304 = vpack.c.b16 %v2202, %v2199
    %v2305 = vpack.c.b16 %v2203, %v2200
    %v2306 = vpack.c.b16 %v2207, %v2204
    %v2307 = vpack.c.b16 %v2208, %v2205
    %v2308 = vpack.c.b16 %v2209, %v2206
    %v2309 = vpack.c.b16 %v2213, %v2210
    %v2310 = vpack.c.b16 %v2214, %v2211
    %v2311 = vpack.c.b16 %v2215, %v2212
    %v2312 = vpack.c.b16 %v2219, %v2216
    %v2313 = vpack.c.b16 %v2220, %v2217
    %v2314 = vpack.c.b16 %v2221, %v2218
    %v2315 = vpack.c.b16 %v2225, %v2222
    %v2316 = vpack.c.b16 %v2226, %v2223
    %v2317 = vpack.c.b16 %v2227, %v2224
    %v2318 = vpack.c.b16 %v2231, %v2228
    %v2319 = vpack.c.b16 %v2232, %v2229
    %v2320 = vpack.c.b16 %v2233, %v2230
    %v2321 = vpack.c.b16 %v2237, %v2234
    %v2322 = vpack.c.b16 %v2238, %v2235
    %v2323 = vpack.c.b16 %v2239, %v2236
    %v2324 = vpack.c.b16 %v2243, %v2240
    %v2325 = vpack.c.b16 %v2244, %v2241
    %v2326 = vpack.c.b16 %v2245, %v2242
    %v2327 = vpack.c.b16 %v2249, %v2246
    %v2328 = vpack.c.b16 %v2250, %v2247
    %v2329 = vpack.c.b16 %v2251, %v2248
    %v2330 = vpack.c.b16 %v2255, %v2252
    %v2331 = vpack.c.b16 %v2256, %v2253
    %v2332 = vpack.c.b16 %v2257, %v2254
    %v2333 = vpack.c.b16 %v2261, %v2258
    %v2334 = vpack.c.b16 %v2262, %v2259
    %v2335 = vpack.c.b16 %v2263, %v2260
    %2408 = vmatpush.bf16.msra.mxu0 %v2285
    %2409 = vmatpush.bf16.msra.mxu0 %v2282
    %2410 = vmatpush.bf16.msra.mxu0 %v2279
    %2411 = vmatpush.bf16.msra.mxu0 %v2276
    %2412 = vmatpush.bf16.msra.mxu0 %v2273
    %2413 = vmatpush.bf16.msra.mxu0 %v2270
    %2414 = vmatpush.bf16.msra.mxu0 %v2267
    %2415 = vmatpush.bf16.msra.mxu0 %v2264
    %2416 = vmatmul.bf16.gmra.mxu0 %v2015
    %v2417 = vpop.f32.mrf.mxu0
    %v2418 = vadd.f32 %v2021, %v2417
    %v2419 = vpop.f32.mrf.mxu0
    %v2420 = vadd.f32 %v2021, %v2419
    %2421 = vmatmul.bf16.gmra.mxu0 %v2018
    %v2422 = vpop.f32.mrf.mxu0
    %v2423 = vadd.f32 %v2021, %v2422
    %v2424 = vpop.f32.mrf.mxu0
    %2425 = vdwg.mxu0
    %2426 = vmatpush.bf16.msra.mxu0 %v2309
    %2427 = vmatpush.bf16.msra.mxu0 %v2306
    %2428 = vmatpush.bf16.msra.mxu0 %v2303
    %2429 = vmatpush.bf16.msra.mxu0 %v2300
    %2430 = vmatpush.bf16.msra.mxu0 %v2297
    %2431 = vmatpush.bf16.msra.mxu0 %v2294
    %2432 = vmatpush.bf16.msra.mxu0 %v2291
    %2433 = vmatpush.bf16.msra.mxu0 %v2288
    %2434 = vmatmul.bf16.gmra.mxu0 %v2016
    %v2435 = vpop.f32.mrf.mxu0
    %v2436 = vadd.f32 %v2418, %v2435
    %v2437 = vpop.f32.mrf.mxu0
    %v2438 = vadd.f32 %v2420, %v2437
    %2439 = vmatmul.bf16.gmra.mxu0 %v2019
    %v2440 = vpop.f32.mrf.mxu0
    %v2441 = vadd.f32 %v2423, %v2440
    %v2442 = vpop.f32.mrf.mxu0
    %2443 = vdwg.mxu0
    %2444 = vmatpush.bf16.msra.mxu0 %v2333
    %2445 = vmatpush.bf16.msra.mxu0 %v2330
    %2446 = vmatpush.bf16.msra.mxu0 %v2327
    %2447 = vmatpush.bf16.msra.mxu0 %v2324
    %2448 = vmatpush.bf16.msra.mxu0 %v2321
    %2449 = vmatpush.bf16.msra.mxu0 %v2318
    %2450 = vmatpush.bf16.msra.mxu0 %v2315
    %2451 = vmatpush.bf16.msra.mxu0 %v2312
    %2452 = vmatmul.bf16.gmra.mxu0 %v2017
    %v2453 = vpop.f32.mrf.mxu0
    %v2454 = vadd.f32 %v2436, %v2453
    %v2455 = vpop.f32.mrf.mxu0
    %v2456 = vadd.f32 %v2438, %v2455
    %2457 = vmatmul.bf16.gmra.mxu0 %v2020
    %v2458 = vpop.f32.mrf.mxu0
    %v2459 = vadd.f32 %v2441, %v2458
    %v2460 = vpop.f32.mrf.mxu0
    %2461 = vdwg.mxu0
    %2462 = vmatpush.bf16.msra.mxu0 %v2286
    %2463 = vmatpush.bf16.msra.mxu0 %v2283
    %2464 = vmatpush.bf16.msra.mxu0 %v2280
    %2465 = vmatpush.bf16.msra.mxu0 %v2277
    %2466 = vmatpush.bf16.msra.mxu0 %v2274
    %2467 = vmatpush.bf16.msra.mxu0 %v2271
    %2468 = vmatpush.bf16.msra.mxu0 %v2268
    %2469 = vmatpush.bf16.msra.mxu0 %v2265
    %2470 = vmatmul.bf16.gmra.mxu0 %v2015
    %v2471 = vpop.f32.mrf.mxu0
    %v2472 = vadd.f32 %v2022, %v2471
    %v2473 = vpop.f32.mrf.mxu0
    %v2474 = vadd.f32 %v2022, %v2473
    %2475 = vmatmul.bf16.gmra.mxu0 %v2018
    %v2476 = vpop.f32.mrf.mxu0
    %v2477 = vadd.f32 %v2022, %v2476
    %v2478 = vpop.f32.mrf.mxu0
    %2479 = vdwg.mxu0
    %2480 = vmatpush.bf16.msra.mxu0 %v2310
    %2481 = vmatpush.bf16.msra.mxu0 %v2307
    %2482 = vmatpush.bf16.msra.mxu0 %v2304
    %2483 = vmatpush.bf16.msra.mxu0 %v2301
    %2484 = vmatpush.bf16.msra.mxu0 %v2298
    %2485 = vmatpush.bf16.msra.mxu0 %v2295
    %2486 = vmatpush.bf16.msra.mxu0 %v2292
    %2487 = vmatpush.bf16.msra.mxu0 %v2289
    %2488 = vmatmul.bf16.gmra.mxu0 %v2016
    %v2489 = vpop.f32.mrf.mxu0
    %v2490 = vadd.f32 %v2472, %v2489
    %v2491 = vpop.f32.mrf.mxu0
    %v2492 = vadd.f32 %v2474, %v2491
    %2493 = vmatmul.bf16.gmra.mxu0 %v2019
    %v2494 = vpop.f32.mrf.mxu0
    %v2495 = vadd.f32 %v2477, %v2494
    %v2496 = vpop.f32.mrf.mxu0
    %2497 = vdwg.mxu0
    %2498 = vmatpush.bf16.msra.mxu0 %v2334
    %2499 = vmatpush.bf16.msra.mxu0 %v2331
    %2500 = vmatpush.bf16.msra.mxu0 %v2328
    %2501 = vmatpush.bf16.msra.mxu0 %v2325
    %2502 = vmatpush.bf16.msra.mxu0 %v2322
    %2503 = vmatpush.bf16.msra.mxu0 %v2319
    %2504 = vmatpush.bf16.msra.mxu0 %v2316
    %2505 = vmatpush.bf16.msra.mxu0 %v2313
    %2506 = vmatmul.bf16.gmra.mxu0 %v2017
    %v2507 = vpop.f32.mrf.mxu0
    %v2508 = vadd.f32 %v2490, %v2507
    %v2509 = vpop.f32.mrf.mxu0
    %v2510 = vadd.f32 %v2492, %v2509
    %2511 = vmatmul.bf16.gmra.mxu0 %v2020
    %v2512 = vpop.f32.mrf.mxu0
    %v2513 = vadd.f32 %v2495, %v2512
    %v2514 = vpop.f32.mrf.mxu0
    %2515 = vdwg.mxu0
    %2516 = vmatpush.bf16.msra.mxu0 %v2287
    %2517 = vmatpush.bf16.msra.mxu0 %v2284
    %2518 = vmatpush.bf16.msra.mxu0 %v2281
    %2519 = vmatpush.bf16.msra.mxu0 %v2278
    %2520 = vmatpush.bf16.msra.mxu0 %v2275
    %2521 = vmatpush.bf16.msra.mxu0 %v2272
    %2522 = vmatpush.bf16.msra.mxu0 %v2269
    %2523 = vmatpush.bf16.msra.mxu0 %v2266
    %2524 = vmatmul.bf16.gmra.mxu0 %v2015
    %v2525 = vpop.f32.mrf.mxu0
    %v2526 = vadd.f32 %v2023, %v2525
    %v2527 = vpop.f32.mrf.mxu0
    %v2528 = vadd.f32 %v2023, %v2527
    %2529 = vmatmul.bf16.gmra.mxu0 %v2018
    %v2530 = vpop.f32.mrf.mxu0
    %v2531 = vadd.f32 %v2023, %v2530
    %v2532 = vpop.f32.mrf.mxu0
    %2533 = vdwg.mxu0
    %2534 = vmatpush.bf16.msra.mxu0 %v2311
    %2535 = vmatpush.bf16.msra.mxu0 %v2308
    %2536 = vmatpush.bf16.msra.mxu0 %v2305
    %2537 = vmatpush.bf16.msra.mxu0 %v2302
    %2538 = vmatpush.bf16.msra.mxu0 %v2299
    %2539 = vmatpush.bf16.msra.mxu0 %v2296
    %2540 = vmatpush.bf16.msra.mxu0 %v2293
    %2541 = vmatpush.bf16.msra.mxu0 %v2290
    %2542 = vmatmul.bf16.gmra.mxu0 %v2016
    %v2543 = vpop.f32.mrf.mxu0
    %v2544 = vadd.f32 %v2526, %v2543
    %v2545 = vpop.f32.mrf.mxu0
    %v2546 = vadd.f32 %v2528, %v2545
    %2547 = vmatmul.bf16.gmra.mxu0 %v2019
    %v2548 = vpop.f32.mrf.mxu0
    %v2549 = vadd.f32 %v2531, %v2548
    %v2550 = vpop.f32.mrf.mxu0
    %2551 = vdwg.mxu0
    %2552 = vmatpush.bf16.msra.mxu0 %v2335
    %2553 = vmatpush.bf16.msra.mxu0 %v2332
    %2554 = vmatpush.bf16.msra.mxu0 %v2329
    %2555 = vmatpush.bf16.msra.mxu0 %v2326
    %2556 = vmatpush.bf16.msra.mxu0 %v2323
    %2557 = vmatpush.bf16.msra.mxu0 %v2320
    %2558 = vmatpush.bf16.msra.mxu0 %v2317
    %2559 = vmatpush.bf16.msra.mxu0 %v2314
    %2560 = vmatmul.bf16.gmra.mxu0 %v2017
    %v2561 = vpop.f32.mrf.mxu0
    %v2562 = vadd.f32 %v2544, %v2561
    %v2563 = vpop.f32.mrf.mxu0
    %v2564 = vadd.f32 %v2546, %v2563
    %2565 = vmatmul.bf16.gmra.mxu0 %v2020
    %v2566 = vpop.f32.mrf.mxu0
    %v2567 = vadd.f32 %v2549, %v2566
    %v2568 = vpop.f32.mrf.mxu0
    %2569 = vdwg.mxu0
    %v2570 = vmax.f32 %v2454, 0.0
    %v2571 = vmax.f32 %v2508, 0.0
    %v2572 = vmax.f32 %v2562, 0.0
    %v2573 = vmax.f32 %v2456, 0.0
    %v2574 = vmax.f32 %v2510, 0.0
    %v2575 = vmax.f32 %v2564, 0.0
    %v2576 = vmax.f32 %v2459, 0.0
    %v2577 = vmax.f32 %v2513, 0.0
    %v2578 = vmax.f32 %v2567, 0.0
    %v2579 = vpack.c.bf16 %v2573, %v2570
    %v2580 = vpack.c.bf16 %v2574, %v2571
    %v2581 = vpack.c.bf16 %v2575, %v2572
    %v2582 = vpack.c.bf16 %v2576, %v2576
    %v2583 = vpack.c.bf16 %v2577, %v2577
    %v2584 = vpack.c.bf16 %v2578, %v2578
    %v2585 = vperm.slane %v136, 7
    %v2586 = vperm.slane %v137, 7
    %v2587 = vperm.slane %v138, 7
    %v2684 = vunpack.c.l.b16 %v1919
    %v2685 = vunpack.c.h.b16 %v1919
    %v2686 = vunpack.c.l.b16 %v1920
    %v2687 = vunpack.c.l.b16 %v1921
    %v2688 = vunpack.c.h.b16 %v1921
    %v2689 = vunpack.c.l.b16 %v1922
    %v2690 = vunpack.c.l.b16 %v1923
    %v2691 = vunpack.c.h.b16 %v1923
    %v2692 = vunpack.c.l.b16 %v1924
    %v2693 = vunpack.c.l.b16 %v1925
    %v2694 = vunpack.c.h.b16 %v1925
    %v2695 = vunpack.c.l.b16 %v1926
    %v2696 = vunpack.c.l.b16 %v1927
    %v2697 = vunpack.c.h.b16 %v1927
    %v2698 = vunpack.c.l.b16 %v1928
    %v2699 = vunpack.c.l.b16 %v1929
    %v2700 = vunpack.c.h.b16 %v1929
    %v2701 = vunpack.c.l.b16 %v1930
    %v2702 = vunpack.c.l.b16 %v1931
    %v2703 = vunpack.c.h.b16 %v1931
    %v2704 = vunpack.c.l.b16 %v1932
    %v2705 = vunpack.c.l.b16 %v1933
    %v2706 = vunpack.c.h.b16 %v1933
    %v2707 = vunpack.c.l.b16 %v1934
    %v2708 = vunpack.c.l.b16 %v1935
    %v2709 = vunpack.c.h.b16 %v1935
    %v2710 = vunpack.c.l.b16 %v1936
    %v2711 = vunpack.c.l.b16 %v1937
    %v2712 = vunpack.c.h.b16 %v1937
    %v2713 = vunpack.c.l.b16 %v1938
    %v2714 = vunpack.c.l.b16 %v1939
    %v2715 = vunpack.c.h.b16 %v1939
    %v2716 = vunpack.c.l.b16 %v1940
    %v2717 = vunpack.c.l.b16 %v1941
    %v2718 = vunpack.c.h.b16 %v1941
    %v2719 = vunpack.c.l.b16 %v1942
    %v2720 = vunpack.c.l.b16 %v1943
    %v2721 = vunpack.c.h.b16 %v1943
    %v2722 = vunpack.c.l.b16 %v1944
    %v2723 = vunpack.c.l.b16 %v1945
    %v2724 = vunpack.c.h.b16 %v1945
    %v2725 = vunpack.c.l.b16 %v1946
    %v2726 = vunpack.c.l.b16 %v1947
    %v2727 = vunpack.c.h.b16 %v1947
    %v2728 = vunpack.c.l.b16 %v1948
    %v2729 = vunpack.c.l.b16 %v1949
    %v2730 = vunpack.c.h.b16 %v1949
    %v2731 = vunpack.c.l.b16 %v1950
    %v2732 = vunpack.c.l.b16 %v1951
    %v2733 = vunpack.c.h.b16 %v1951
    %v2734 = vunpack.c.l.b16 %v1952
    %v2735 = vunpack.c.l.b16 %v1953
    %v2736 = vunpack.c.h.b16 %v1953
    %v2737 = vunpack.c.l.b16 %v1954
    %v2738 = vunpack.c.l.b16 %v1955
    %v2739 = vunpack.c.h.b16 %v1955
    %v2740 = vunpack.c.l.b16 %v1956
    %v2741 = vunpack.c.l.b16 %v1957
    %v2742 = vunpack.c.h.b16 %v1957
    %v2743 = vunpack.c.l.b16 %v1958
    %v2744 = vunpack.c.l.b16 %v1959
    %v2745 = vunpack.c.h.b16 %v1959
    %v2746 = vunpack.c.l.b16 %v1960
    %v2747 = vunpack.c.l.b16 %v1961
    %v2748 = vunpack.c.h.b16 %v1961
    %v2749 = vunpack.c.l.b16 %v1962
    %v2750 = vunpack.c.l.b16 %v1963
    %v2751 = vunpack.c.h.b16 %v1963
    %v2752 = vunpack.c.l.b16 %v1964
    %v2753 = vunpack.c.l.b16 %v1965
    %v2754 = vunpack.c.h.b16 %v1965
    %v2755 = vunpack.c.l.b16 %v1966
    %v2756 = vunpack.c.l.b16 %v1967
    %v2757 = vunpack.c.h.b16 %v1967
    %v2758 = vunpack.c.l.b16 %v1968
    %v2759 = vunpack.c.l.b16 %v1969
    %v2760 = vunpack.c.h.b16 %v1969
    %v2761 = vunpack.c.l.b16 %v1970
    %v2762 = vunpack.c.l.b16 %v1971
    %v2763 = vunpack.c.h.b16 %v1971
    %v2764 = vunpack.c.l.b16 %v1972
    %v2765 = vunpack.c.l.b16 %v1973
    %v2766 = vunpack.c.h.b16 %v1973
    %v2767 = vunpack.c.l.b16 %v1974
    %v2768 = vunpack.c.l.b16 %v1975
    %v2769 = vunpack.c.h.b16 %v1975
    %v2770 = vunpack.c.l.b16 %v1976
    %v2771 = vunpack.c.l.b16 %v1977
    %v2772 = vunpack.c.h.b16 %v1977
    %v2773 = vunpack.c.l.b16 %v1978
    %v2774 = vunpack.c.l.b16 %v1979
    %v2775 = vunpack.c.h.b16 %v1979
    %v2776 = vunpack.c.l.b16 %v1980
    %v2777 = vunpack.c.l.b16 %v1981
    %v2778 = vunpack.c.h.b16 %v1981
    %v2779 = vunpack.c.l.b16 %v1982
    %v2780 = vunpack.c.l.b16 %v1983
    %v2781 = vunpack.c.h.b16 %v1983
    %v2782 = vunpack.c.l.b16 %v1984
    %v2783 = vunpack.c.l.b16 %v1985
    %v2784 = vunpack.c.h.b16 %v1985
    %v2785 = vunpack.c.l.b16 %v1986
    %v2786 = vunpack.c.l.b16 %v1987
    %v2787 = vunpack.c.h.b16 %v1987
    %v2788 = vunpack.c.l.b16 %v1988
    %v2789 = vunpack.c.l.b16 %v1989
    %v2790 = vunpack.c.h.b16 %v1989
    %v2791 = vunpack.c.l.b16 %v1990
    %v2792 = vunpack.c.l.b16 %v1991
    %v2793 = vunpack.c.h.b16 %v1991
    %v2794 = vunpack.c.l.b16 %v1992
    %v2795 = vunpack.c.l.b16 %v1993
    %v2796 = vunpack.c.h.b16 %v1993
    %v2797 = vunpack.c.l.b16 %v1994
    %v2798 = vunpack.c.l.b16 %v1995
    %v2799 = vunpack.c.h.b16 %v1995
    %v2800 = vunpack.c.l.b16 %v1996
    %v2801 = vunpack.c.l.b16 %v1997
    %v2802 = vunpack.c.h.b16 %v1997
    %v2803 = vunpack.c.l.b16 %v1998
    %v2804 = vunpack.c.l.b16 %v1999
    %v2805 = vunpack.c.h.b16 %v1999
    %v2806 = vunpack.c.l.b16 %v2000
    %v2807 = vunpack.c.l.b16 %v2001
    %v2808 = vunpack.c.h.b16 %v2001
    %v2809 = vunpack.c.l.b16 %v2002
    %v2810 = vunpack.c.l.b16 %v2003
    %v2811 = vunpack.c.h.b16 %v2003
    %v2812 = vunpack.c.l.b16 %v2004
    %v2813 = vunpack.c.l.b16 %v2005
    %v2814 = vunpack.c.h.b16 %v2005
    %v2815 = vunpack.c.l.b16 %v2006
    %v2816 = vunpack.c.l.b16 %v2007
    %v2817 = vunpack.c.h.b16 %v2007
    %v2818 = vunpack.c.l.b16 %v2008
    %v2819 = vunpack.c.l.b16 %v2009
    %v2820 = vunpack.c.h.b16 %v2009
    %v2821 = vunpack.c.l.b16 %v2010
    %v2822 = vunpack.c.l.b16 %v2011
    %v2823 = vunpack.c.h.b16 %v2011
    %v2824 = vunpack.c.l.b16 %v2012
    %v2825 = vunpack.c.l.b16 %v2013
    %v2826 = vunpack.c.h.b16 %v2013
    %v2827 = vunpack.c.l.b16 %v2014
    %v2828 = vpack.c.b16 %v2687, %v2684
    %v2829 = vpack.c.b16 %v2688, %v2685
    %v2830 = vpack.c.b16 %v2689, %v2686
    %v2831 = vpack.c.b16 %v2693, %v2690
    %v2832 = vpack.c.b16 %v2694, %v2691
    %v2833 = vpack.c.b16 %v2695, %v2692
    %v2834 = vpack.c.b16 %v2699, %v2696
    %v2835 = vpack.c.b16 %v2700, %v2697
    %v2836 = vpack.c.b16 %v2701, %v2698
    %v2837 = vpack.c.b16 %v2705, %v2702
    %v2838 = vpack.c.b16 %v2706, %v2703
    %v2839 = vpack.c.b16 %v2707, %v2704
    %v2840 = vpack.c.b16 %v2711, %v2708
    %v2841 = vpack.c.b16 %v2712, %v2709
    %v2842 = vpack.c.b16 %v2713, %v2710
    %v2843 = vpack.c.b16 %v2717, %v2714
    %v2844 = vpack.c.b16 %v2718, %v2715
    %v2845 = vpack.c.b16 %v2719, %v2716
    %v2846 = vpack.c.b16 %v2723, %v2720
    %v2847 = vpack.c.b16 %v2724, %v2721
    %v2848 = vpack.c.b16 %v2725, %v2722
    %v2849 = vpack.c.b16 %v2729, %v2726
    %v2850 = vpack.c.b16 %v2730, %v2727
    %v2851 = vpack.c.b16 %v2731, %v2728
    %v2852 = vpack.c.b16 %v2735, %v2732
    %v2853 = vpack.c.b16 %v2736, %v2733
    %v2854 = vpack.c.b16 %v2737, %v2734
    %v2855 = vpack.c.b16 %v2741, %v2738
    %v2856 = vpack.c.b16 %v2742, %v2739
    %v2857 = vpack.c.b16 %v2743, %v2740
    %v2858 = vpack.c.b16 %v2747, %v2744
    %v2859 = vpack.c.b16 %v2748, %v2745
    %v2860 = vpack.c.b16 %v2749, %v2746
    %v2861 = vpack.c.b16 %v2753, %v2750
    %v2862 = vpack.c.b16 %v2754, %v2751
    %v2863 = vpack.c.b16 %v2755, %v2752
    %v2864 = vpack.c.b16 %v2759, %v2756
    %v2865 = vpack.c.b16 %v2760, %v2757
    %v2866 = vpack.c.b16 %v2761, %v2758
    %v2867 = vpack.c.b16 %v2765, %v2762
    %v2868 = vpack.c.b16 %v2766, %v2763
    %v2869 = vpack.c.b16 %v2767, %v2764
    %v2870 = vpack.c.b16 %v2771, %v2768
    %v2871 = vpack.c.b16 %v2772, %v2769
    %v2872 = vpack.c.b16 %v2773, %v2770
    %v2873 = vpack.c.b16 %v2777, %v2774
    %v2874 = vpack.c.b16 %v2778, %v2775
    %v2875 = vpack.c.b16 %v2779, %v2776
    %v2876 = vpack.c.b16 %v2783, %v2780
    %v2877 = vpack.c.b16 %v2784, %v2781
    %v2878 = vpack.c.b16 %v2785, %v2782
    %v2879 = vpack.c.b16 %v2789, %v2786
    %v2880 = vpack.c.b16 %v2790, %v2787
    %v2881 = vpack.c.b16 %v2791, %v2788
    %v2882 = vpack.c.b16 %v2795, %v2792
    %v2883 = vpack.c.b16 %v2796, %v2793
    %v2884 = vpack.c.b16 %v2797, %v2794
    %v2885 = vpack.c.b16 %v2801, %v2798
    %v2886 = vpack.c.b16 %v2802, %v2799
    %v2887 = vpack.c.b16 %v2803, %v2800
    %v2888 = vpack.c.b16 %v2807, %v2804
    %v2889 = vpack.c.b16 %v2808, %v2805
    %v2890 = vpack.c.b16 %v2809, %v2806
    %v2891 = vpack.c.b16 %v2813, %v2810
    %v2892 = vpack.c.b16 %v2814, %v2811
    %v2893 = vpack.c.b16 %v2815, %v2812
    %v2894 = vpack.c.b16 %v2819, %v2816
    %v2895 = vpack.c.b16 %v2820, %v2817
    %v2896 = vpack.c.b16 %v2821, %v2818
    %v2897 = vpack.c.b16 %v2825, %v2822
    %v2898 = vpack.c.b16 %v2826, %v2823
    %v2899 = vpack.c.b16 %v2827, %v2824
    %2972 = vmatpush.bf16.msra.mxu0 %v2849
    %2973 = vmatpush.bf16.msra.mxu0 %v2846
    %2974 = vmatpush.bf16.msra.mxu0 %v2843
    %2975 = vmatpush.bf16.msra.mxu0 %v2840
    %2976 = vmatpush.bf16.msra.mxu0 %v2837
    %2977 = vmatpush.bf16.msra.mxu0 %v2834
    %2978 = vmatpush.bf16.msra.mxu0 %v2831
    %2979 = vmatpush.bf16.msra.mxu0 %v2828
    %2980 = vmatmul.bf16.gmra.mxu0 %v2579
    %v2981 = vpop.f32.mrf.mxu0
    %v2982 = vadd.f32 %v2585, %v2981
    %v2983 = vpop.f32.mrf.mxu0
    %v2984 = vadd.f32 %v2585, %v2983
    %2985 = vmatmul.bf16.gmra.mxu0 %v2582
    %v2986 = vpop.f32.mrf.mxu0
    %v2987 = vadd.f32 %v2585, %v2986
    %v2988 = vpop.f32.mrf.mxu0
    %2989 = vdwg.mxu0
    %2990 = vmatpush.bf16.msra.mxu0 %v2873
    %2991 = vmatpush.bf16.msra.mxu0 %v2870
    %2992 = vmatpush.bf16.msra.mxu0 %v2867
    %2993 = vmatpush.bf16.msra.mxu0 %v2864
    %2994 = vmatpush.bf16.msra.mxu0 %v2861
    %2995 = vmatpush.bf16.msra.mxu0 %v2858
    %2996 = vmatpush.bf16.msra.mxu0 %v2855
    %2997 = vmatpush.bf16.msra.mxu0 %v2852
    %2998 = vmatmul.bf16.gmra.mxu0 %v2580
    %v2999 = vpop.f32.mrf.mxu0
    %v3000 = vadd.f32 %v2982, %v2999
    %v3001 = vpop.f32.mrf.mxu0
    %v3002 = vadd.f32 %v2984, %v3001
    %3003 = vmatmul.bf16.gmra.mxu0 %v2583
    %v3004 = vpop.f32.mrf.mxu0
    %v3005 = vadd.f32 %v2987, %v3004
    %v3006 = vpop.f32.mrf.mxu0
    %3007 = vdwg.mxu0
    %3008 = vmatpush.bf16.msra.mxu0 %v2897
    %3009 = vmatpush.bf16.msra.mxu0 %v2894
    %3010 = vmatpush.bf16.msra.mxu0 %v2891
    %3011 = vmatpush.bf16.msra.mxu0 %v2888
    %3012 = vmatpush.bf16.msra.mxu0 %v2885
    %3013 = vmatpush.bf16.msra.mxu0 %v2882
    %3014 = vmatpush.bf16.msra.mxu0 %v2879
    %3015 = vmatpush.bf16.msra.mxu0 %v2876
    %3016 = vmatmul.bf16.gmra.mxu0 %v2581
    %v3017 = vpop.f32.mrf.mxu0
    %v3018 = vadd.f32 %v3000, %v3017
    %v3019 = vpop.f32.mrf.mxu0
    %v3020 = vadd.f32 %v3002, %v3019
    %3021 = vmatmul.bf16.gmra.mxu0 %v2584
    %v3022 = vpop.f32.mrf.mxu0
    %v3023 = vadd.f32 %v3005, %v3022
    %v3024 = vpop.f32.mrf.mxu0
    %3025 = vdwg.mxu0
    %3026 = vmatpush.bf16.msra.mxu0 %v2850
    %3027 = vmatpush.bf16.msra.mxu0 %v2847
    %3028 = vmatpush.bf16.msra.mxu0 %v2844
    %3029 = vmatpush.bf16.msra.mxu0 %v2841
    %3030 = vmatpush.bf16.msra.mxu0 %v2838
    %3031 = vmatpush.bf16.msra.mxu0 %v2835
    %3032 = vmatpush.bf16.msra.mxu0 %v2832
    %3033 = vmatpush.bf16.msra.mxu0 %v2829
    %3034 = vmatmul.bf16.gmra.mxu0 %v2579
    %v3035 = vpop.f32.mrf.mxu0
    %v3036 = vadd.f32 %v2586, %v3035
    %v3037 = vpop.f32.mrf.mxu0
    %v3038 = vadd.f32 %v2586, %v3037
    %3039 = vmatmul.bf16.gmra.mxu0 %v2582
    %v3040 = vpop.f32.mrf.mxu0
    %v3041 = vadd.f32 %v2586, %v3040
    %v3042 = vpop.f32.mrf.mxu0
    %3043 = vdwg.mxu0
    %3044 = vmatpush.bf16.msra.mxu0 %v2874
    %3045 = vmatpush.bf16.msra.mxu0 %v2871
    %3046 = vmatpush.bf16.msra.mxu0 %v2868
    %3047 = vmatpush.bf16.msra.mxu0 %v2865
    %3048 = vmatpush.bf16.msra.mxu0 %v2862
    %3049 = vmatpush.bf16.msra.mxu0 %v2859
    %3050 = vmatpush.bf16.msra.mxu0 %v2856
    %3051 = vmatpush.bf16.msra.mxu0 %v2853
    %3052 = vmatmul.bf16.gmra.mxu0 %v2580
    %v3053 = vpop.f32.mrf.mxu0
    %v3054 = vadd.f32 %v3036, %v3053
    %v3055 = vpop.f32.mrf.mxu0
    %v3056 = vadd.f32 %v3038, %v3055
    %3057 = vmatmul.bf16.gmra.mxu0 %v2583
    %v3058 = vpop.f32.mrf.mxu0
    %v3059 = vadd.f32 %v3041, %v3058
    %v3060 = vpop.f32.mrf.mxu0
    %3061 = vdwg.mxu0
    %3062 = vmatpush.bf16.msra.mxu0 %v2898
    %3063 = vmatpush.bf16.msra.mxu0 %v2895
    %3064 = vmatpush.bf16.msra.mxu0 %v2892
    %3065 = vmatpush.bf16.msra.mxu0 %v2889
    %3066 = vmatpush.bf16.msra.mxu0 %v2886
    %3067 = vmatpush.bf16.msra.mxu0 %v2883
    %3068 = vmatpush.bf16.msra.mxu0 %v2880
    %3069 = vmatpush.bf16.msra.mxu0 %v2877
    %3070 = vmatmul.bf16.gmra.mxu0 %v2581
    %v3071 = vpop.f32.mrf.mxu0
    %v3072 = vadd.f32 %v3054, %v3071
    %v3073 = vpop.f32.mrf.mxu0
    %v3074 = vadd.f32 %v3056, %v3073
    %3075 = vmatmul.bf16.gmra.mxu0 %v2584
    %v3076 = vpop.f32.mrf.mxu0
    %v3077 = vadd.f32 %v3059, %v3076
    %v3078 = vpop.f32.mrf.mxu0
    %3079 = vdwg.mxu0
    %3080 = vmatpush.bf16.msra.mxu0 %v2851
    %3081 = vmatpush.bf16.msra.mxu0 %v2848
    %3082 = vmatpush.bf16.msra.mxu0 %v2845
    %3083 = vmatpush.bf16.msra.mxu0 %v2842
    %3084 = vmatpush.bf16.msra.mxu0 %v2839
    %3085 = vmatpush.bf16.msra.mxu0 %v2836
    %3086 = vmatpush.bf16.msra.mxu0 %v2833
    %3087 = vmatpush.bf16.msra.mxu0 %v2830
    %3088 = vmatmul.bf16.gmra.mxu0 %v2579
    %v3089 = vpop.f32.mrf.mxu0
    %v3090 = vadd.f32 %v2587, %v3089
    %v3091 = vpop.f32.mrf.mxu0
    %v3092 = vadd.f32 %v2587, %v3091
    %3093 = vmatmul.bf16.gmra.mxu0 %v2582
    %v3094 = vpop.f32.mrf.mxu0
    %v3095 = vadd.f32 %v2587, %v3094
    %v3096 = vpop.f32.mrf.mxu0
    %3097 = vdwg.mxu0
    %3098 = vmatpush.bf16.msra.mxu0 %v2875
    %3099 = vmatpush.bf16.msra.mxu0 %v2872
    %3100 = vmatpush.bf16.msra.mxu0 %v2869
    %3101 = vmatpush.bf16.msra.mxu0 %v2866
    %3102 = vmatpush.bf16.msra.mxu0 %v2863
    %3103 = vmatpush.bf16.msra.mxu0 %v2860
    %3104 = vmatpush.bf16.msra.mxu0 %v2857
    %3105 = vmatpush.bf16.msra.mxu0 %v2854
    %3106 = vmatmul.bf16.gmra.mxu0 %v2580
    %v3107 = vpop.f32.mrf.mxu0
    %v3108 = vadd.f32 %v3090, %v3107
    %v3109 = vpop.f32.mrf.mxu0
    %v3110 = vadd.f32 %v3092, %v3109
    %3111 = vmatmul.bf16.gmra.mxu0 %v2583
    %v3112 = vpop.f32.mrf.mxu0
    %v3113 = vadd.f32 %v3095, %v3112
    %v3114 = vpop.f32.mrf.mxu0
    %3115 = vdwg.mxu0
    %3116 = vmatpush.bf16.msra.mxu0 %v2899
    %3117 = vmatpush.bf16.msra.mxu0 %v2896
    %3118 = vmatpush.bf16.msra.mxu0 %v2893
    %3119 = vmatpush.bf16.msra.mxu0 %v2890
    %3120 = vmatpush.bf16.msra.mxu0 %v2887
    %3121 = vmatpush.bf16.msra.mxu0 %v2884
    %3122 = vmatpush.bf16.msra.mxu0 %v2881
    %3123 = vmatpush.bf16.msra.mxu0 %v2878
    %3124 = vmatmul.bf16.gmra.mxu0 %v2581
    %v3125 = vpop.f32.mrf.mxu0
    %v3126 = vadd.f32 %v3108, %v3125
    %v3127 = vpop.f32.mrf.mxu0
    %v3128 = vadd.f32 %v3110, %v3127
    %3129 = vmatmul.bf16.gmra.mxu0 %v2584
    %v3130 = vpop.f32.mrf.mxu0
    %v3131 = vadd.f32 %v3113, %v3130
    %v3132 = vpop.f32.mrf.mxu0
    %3133 = vdwg.mxu0
    %v3134 = vadd.f32 %v380, %v3018
    %v3135 = vadd.f32 %v381, %v3072
    %v3136 = vadd.f32 %v382, %v3126
    %v3137 = vadd.f32 %v383, %v3020
    %v3138 = vadd.f32 %v384, %v3074
    %v3139 = vadd.f32 %v385, %v3128
    %v3140 = vadd.f32 %v386, %v3023
    %v3141 = vadd.f32 %v387, %v3077
    %v3142 = vadd.f32 %v388, %v3131
    %v3143 = vadd.f32 %v3134, %v3135
    %v3144 = vadd.f32 %v3143, %v3136
    %3145 = vadd.xlane.f32.xlu0 %v3144
    %v3146 = vpop.xlane.xlu0 %3145
    %v3147 = vadd.f32 %v3137, %v3138
    %v3148 = vadd.f32 %v3147, %v3139
    %3149 = vadd.xlane.f32.xlu0 %v3148
    %v3150 = vpop.xlane.xlu0 %3149
    %v3151 = vadd.f32 %v3140, %v3141
    %v3152 = vadd.f32 %v3151, %v3142
    %3153 = vadd.xlane.f32.xlu0 %v3152
    %v3154 = vpop.xlane.xlu0 %3153
    %v3155 = vmul.f32 %v3146, %v169
    %v3156 = vmul.f32 %v3150, %v169
    %v3157 = vmul.f32 %v3154, %v169
    %v3158 = vsub.f32 %v3134, %v3155
    %v3159 = vsub.f32 %v3135, %v3155
    %v3160 = vsub.f32 %v3136, %v3155
    %v3161 = vsub.f32 %v3137, %v3156
    %v3162 = vsub.f32 %v3138, %v3156
    %v3163 = vsub.f32 %v3139, %v3156
    %v3164 = vsub.f32 %v3140, %v3157
    %v3165 = vsub.f32 %v3141, %v3157
    %v3166 = vsub.f32 %v3142, %v3157
    %v3167 = vmul.f32 %v3158, %v3158
    %v3168 = vmul.f32 %v3159, %v3159
    %v3169 = vmul.f32 %v3160, %v3160
    %v3170 = vmul.f32 %v3161, %v3161
    %v3171 = vmul.f32 %v3162, %v3162
    %v3172 = vmul.f32 %v3163, %v3163
    %v3173 = vmul.f32 %v3164, %v3164
    %v3174 = vmul.f32 %v3165, %v3165
    %v3175 = vmul.f32 %v3166, %v3166
    %v3176 = vadd.f32 %v3167, %v3168
    %v3177 = vadd.f32 %v3176, %v3169
    %3178 = vadd.xlane.f32.xlu0 %v3177
    %v3179 = vpop.xlane.xlu0 %3178
    %v3180 = vadd.f32 %v3170, %v3171
    %v3181 = vadd.f32 %v3180, %v3172
    %3182 = vadd.xlane.f32.xlu0 %v3181
    %v3183 = vpop.xlane.xlu0 %3182
    %v3184 = vadd.f32 %v3173, %v3174
    %v3185 = vadd.f32 %v3184, %v3175
    %3186 = vadd.xlane.f32.xlu0 %v3185
    %v3187 = vpop.xlane.xlu0 %3186
    %v3188 = vmul.f32 %v3179, %v169
    %v3189 = vmul.f32 %v3183, %v169
    %v3190 = vmul.f32 %v3187, %v169
    %v3191 = vadd.f32 %v3188, 1e-05
    %v3192 = vadd.f32 %v3189, 1e-05
    %v3193 = vadd.f32 %v3190, 1e-05
    %v3194 = vrsqrt.pop %v3191
    %v3195 = vmul.f32 %v3194, %v3191
    %v3196 = vmul.f32 %v3195, %v3194
    %v3197 = vmul.f32 0.5, %v3196
    %v3198 = vsub.f32 1.5, %v3197
    %v3199 = vmul.f32 %v3194, %v3198
    %vm3200 = vweird.f32 %v3191
    %vm3201 = vweird.f32 %v3194
    %vm3202 = vmor %vm3200, %vm3201
    %v3203 = vsel %vm3202, %v3194, %v3199
    %v3204 = vrsqrt.pop %v3192
    %v3205 = vmul.f32 %v3204, %v3192
    %v3206 = vmul.f32 %v3205, %v3204
    %v3207 = vmul.f32 0.5, %v3206
    %v3208 = vsub.f32 1.5, %v3207
    %v3209 = vmul.f32 %v3204, %v3208
    %vm3210 = vweird.f32 %v3192
    %vm3211 = vweird.f32 %v3204
    %vm3212 = vmor %vm3210, %vm3211
    %v3213 = vsel %vm3212, %v3204, %v3209
    %v3214 = vrsqrt.pop %v3193
    %v3215 = vmul.f32 %v3214, %v3193
    %v3216 = vmul.f32 %v3215, %v3214
    %v3217 = vmul.f32 0.5, %v3216
    %v3218 = vsub.f32 1.5, %v3217
    %v3219 = vmul.f32 %v3214, %v3218
    %vm3220 = vweird.f32 %v3193
    %vm3221 = vweird.f32 %v3214
    %vm3222 = vmor %vm3220, %vm3221
    %v3223 = vsel %vm3222, %v3214, %v3219
    %v3224 = vmul.f32 %v3158, %v3203
    %v3225 = vmul.f32 %v3159, %v3203
    %v3226 = vmul.f32 %v3160, %v3203
    %v3227 = vmul.f32 %v3161, %v3213
    %v3228 = vmul.f32 %v3162, %v3213
    %v3229 = vmul.f32 %v3163, %v3213
    %v3230 = vmul.f32 %v3164, %v3223
    %v3231 = vmul.f32 %v3165, %v3223
    %v3232 = vmul.f32 %v3166, %v3223
    %v3233 = vperm.slane %v139, 0
    %v3234 = vperm.slane %v140, 0
    %v3235 = vperm.slane %v141, 0
    %v3236 = vmul.f32 %v3224, %v3233
    %v3237 = vmul.f32 %v3225, %v3234
    %v3238 = vmul.f32 %v3226, %v3235
    %v3239 = vmul.f32 %v3227, %v3233
    %v3240 = vmul.f32 %v3228, %v3234
    %v3241 = vmul.f32 %v3229, %v3235
    %v3242 = vmul.f32 %v3230, %v3233
    %v3243 = vmul.f32 %v3231, %v3234
    %v3244 = vmul.f32 %v3232, %v3235
    %v3245 = vperm.slane %v139, 1
    %v3246 = vperm.slane %v140, 1
    %v3247 = vperm.slane %v141, 1
    %v3248 = vadd.f32 %v3236, %v3245
    %v3249 = vadd.f32 %v3237, %v3246
    %v3250 = vadd.f32 %v3238, %v3247
    %v3251 = vadd.f32 %v3239, %v3245
    %v3252 = vadd.f32 %v3240, %v3246
    %v3253 = vadd.f32 %v3241, %v3247
    %v3254 = vadd.f32 %v3242, %v3245
    %v3255 = vadd.f32 %v3243, %v3246
    %v3256 = vadd.f32 %v3244, %v3247
    %v3257 = vadd.f32 %v1814, %v3248
    %v3258 = vadd.f32 %v1815, %v3249
    %v3259 = vadd.f32 %v1816, %v3250
    %v3260 = vadd.f32 %v1817, %v3251
    %v3261 = vadd.f32 %v1818, %v3252
    %v3262 = vadd.f32 %v1819, %v3253
    %v3263 = vadd.f32 %v1820, %v3254
    %v3264 = vadd.f32 %v1821, %v3255
    %v3265 = vadd.f32 %v1822, %v3256
    %3266 = vst [vmem:[#allocation14] sm:$0xff] %v3257
    %3267 = vst [vmem:[#allocation14 + $0x8] sm:$0xff] %v3258
    %3268 = vst [vmem:[#allocation14 + $0x10] sm:$0xff] %v3259
    %3269 = vst [vmem:[#allocation14 + $0x18] sm:$0xff] %v3260
    %3270 = vst [vmem:[#allocation14 + $0x20] sm:$0xff] %v3261
    %3271 = vst [vmem:[#allocation14 + $0x28] sm:$0xff] %v3262
    %3272 = vst [vmem:[#allocation14 + $0x30] sm:$0xff] %v3263
    %3273 = vst [vmem:[#allocation14 + $0x38] sm:$0xff] %v3264
    %3274 = vst [vmem:[#allocation14 + $0x40] sm:$0xff] %v3265
    // Predicated region
    $region58: #{tpu_custom_call.1} parent=1 // pred_check
      _
    $region59: #{tpu_custom_call.1} parent=1 // pred_check_branch
      %3276 = sbr.rel (0) target = $region61
    $region60: #{tpu_custom_call.1} parent=1 // pred_region
      %3278 = vsyncadd [#allocation4], 0
      %s3279 = sshll.u32 [#allocation14], 4
      %s3280 = int_to_ptr.vmem [resolvable:$true] %s3279
      %s3281 = sshll.u32 %s7, 4
      %s3282 = int_to_ptr.hbm [resolvable:$true] %s3281
      %3287 = dma.vmem_to_hbm [thread:$0]  %s3280, 1152, %s3282, [#allocation4], 384, 384, 24
    $region61: #{tpu_custom_call.1} parent=1 // pred_fallthru
      _
    // Predicated region
    $region62: #{tpu_custom_call.1} parent=1 // pred_check
      _
    $region63: #{tpu_custom_call.1} parent=1 // pred_check_branch
      %3289 = sbr.rel (0) target = $region65
    $region64: #{tpu_custom_call.1} parent=1 // pred_region
      %3291 = dma.done [#allocation4], 1152
    $region65: #{tpu_custom_call.1} parent=1 // pred_fallthru
      _
    %3292 = vsyncpa [#allocation3], 1
    %3293 = vsyncpa [#allocation6], 1
    %3294 = vsyncpa [#allocation9], 1
    %3295 = vsyncpa [#allocation12], 1
    %3296 = vsyncpa [#allocation4], 1

</llo_original>
